<compile_context>
chip_gen: v5e
topology: v5e:2x2
jax: 0.10.0
libtpu: 0.0.40
codegen_flags: <defaults>
</compile_context>

<pallas_src>
import jax
import jax.numpy as jnp
from jax.experimental import pallas as pl
from jax.experimental.pallas import tpu as pltpu

# Linear(168,84) -> (84,42) -> (42,42) -> (42,21) -> (21,10) -> (10,1)
LAYER_SIZES = [168, 84, 42, 42, 21, 10, 1]
LEAKY_SLOPE = 0.01  # nn.LeakyReLU() default negative_slope


def _leaky_relu(v):
    return jnp.where(v >= 0, v, LEAKY_SLOPE * v)


def _round_up(x, m):
    return (x + m - 1) // m * m


def discriminator_kernel(
    x_ref,
    w1_ref, b1_ref,
    w2_ref, b2_ref,
    w3_ref, b3_ref,
    w4_ref, b4_ref,
    w5_ref, b5_ref,
    w6_ref, b6_ref,
    o_ref,
):
    """One batch tile (columns): 5 MXU layers (bf16 ops, f32 acc) + f32 VPU tail.

    Activations are (features, TM); weights are PyTorch-layout (out, in);
    biases are (out, 1) broadcasting over the lane/batch axis.
    """
    h = x_ref[...]                                          # (168, TM) f32
    for w_ref, b_ref in (
        (w1_ref, b1_ref),
        (w2_ref, b2_ref),
        (w3_ref, b3_ref),
        (w4_ref, b4_ref),
        (w5_ref, b5_ref),
    ):
        acc = jnp.dot(w_ref[...], h.astype(jnp.bfloat16),
                      preferred_element_type=jnp.float32)   # (out, TM) f32
        h = _leaky_relu(acc + b_ref[...])                   # f32 bias + activation

    # Final Linear(10 -> 1) + LeakyReLU: full-f32 broadcast-mul + sublane reduce
    # (VPU/XLU); w6 is a (10, 1) f32 column vector, b6 is (1, 1) f32.
    y = jnp.sum(h * w6_ref[...], axis=0, keepdims=True) + b6_ref[...]   # (1, TM)
    o_ref[...] = _leaky_relu(y).astype(o_ref.dtype)


def init_params(key):
    """Deterministic init (uniform +/- 1/sqrt(fan_in), like torch.nn.Linear).

    Returns PyTorch-layout params: w: (out, in) f32, b: (out,) f32.
    """
    params = []
    for i in range(len(LAYER_SIZES) - 1):
        fan_in, fan_out = LAYER_SIZES[i], LAYER_SIZES[i + 1]
        key, kw, kb = jax.random.split(key, 3)
        bound = 1.0 / jnp.sqrt(jnp.float32(fan_in))
        w = jax.random.uniform(kw, (fan_out, fan_in), jnp.float32, -bound, bound)
        b = jax.random.uniform(kb, (fan_out,), jnp.float32, -bound, bound)
        params.append((w, b))
    return params


def discriminator_forward(x, params, *, block_cols=2048, min_grid_steps=4):
    """x: (batch, 168) f32. params: list of (w: (out,in) f32, b: (out,) f32).

    Returns (batch, 1) f32.
    """
    batch, in_dim = x.shape
    assert in_dim == LAYER_SIZES[0]

    # Transposed dataflow: batch on the lane axis.  f32 in, cast to bf16 in-kernel.
    x_t = jnp.transpose(x).astype(jnp.float32)              # (168, batch)

    # Tile columns: multiple of 128 (lane axis), >= min_grid_steps grid steps
    # (megacore slack on v7x), capped at block_cols (amortize per-step overhead).
    tm = min(block_cols, _round_up(pl.cdiv(batch, min_grid_steps), 128))
    tm = max(tm, 128)
    grid = (pl.cdiv(batch, tm),)

    batch_map = lambda i: (0, i)   # x / out tiles stream along the batch axis
    const_map = lambda i: (0, 0)   # weights/biases stay VMEM-resident across steps

    flat_args = [x_t]
    in_specs = [pl.BlockSpec((in_dim, tm), batch_map)]
    n_layers = len(params)
    for li, (w, b) in enumerate(params):
        if li == n_layers - 1:
            w_arg = w.astype(jnp.float32).reshape(-1, 1)     # (10, 1) f32, VPU tail
        else:
            w_arg = w.astype(jnp.bfloat16)                   # (out, in) bf16, MXU
        b_arg = b.astype(jnp.float32).reshape(-1, 1)         # (out, 1) f32
        flat_args += [w_arg, b_arg]
        in_specs += [
            pl.BlockSpec(w_arg.shape, const_map),
            pl.BlockSpec(b_arg.shape, const_map),
        ]

    flops = 2 * batch * sum(
        LAYER_SIZES[i] * LAYER_SIZES[i + 1] for i in range(len(LAYER_SIZES) - 1)
    )
    param_bytes = sum(int(a.size) * a.dtype.itemsize for a in flat_args[1:])
    bytes_accessed = batch * in_dim * 4 + batch * LAYER_SIZES[-1] * 4 + param_bytes

    out = pl.pallas_call(
        discriminator_kernel,
        out_shape=jax.ShapeDtypeStruct((1, batch), jnp.float32),
        grid=grid,
        in_specs=in_specs,
        out_specs=pl.BlockSpec((1, tm), batch_map),
        compiler_params=pltpu.CompilerParams(
            dimension_semantics=("parallel",)),
        cost_estimate=pl.CostEstimate(
            flops=flops, transcendentals=0, bytes_accessed=bytes_accessed),
    )(*flat_args)

    return jnp.transpose(out)                                # (batch, 1)


def reference_forward_f32(x, params):
    """Pure-f32 reference with exact PyTorch-module semantics."""
    h = x
    for w, b in params:
        h = _leaky_relu(h @ w.T + b)
    return h


def reference_forward_mixed(x, params):
    """Pure-JAX reference using the same transposed bf16/f32 math as the kernel."""
    h = jnp.transpose(x).astype(jnp.float32)                 # (168, batch)
    for w, b in params[:-1]:
        acc = jnp.dot(w.astype(jnp.bfloat16), h.astype(jnp.bfloat16),
                      preferred_element_type=jnp.float32)
        h = _leaky_relu(acc + b[:, None])
    w6, b6 = params[-1]
    y = jnp.sum(h * w6.reshape(-1, 1), axis=0, keepdims=True) + b6[:, None]
    return jnp.transpose(_leaky_relu(y))                     # (batch, 1)


if __name__ == "__main__":
    key = jax.random.PRNGKey(0)
    key, kx = jax.random.split(key)
    params = init_params(key)

    # 2000 rows: not a multiple of the column tile -> exercises the partial
    # last block and a multi-step (megacore-shardable) batch grid.
    batch = 2000
    x = jax.random.normal(kx, (batch, LAYER_SIZES[0]), jnp.float32)

    out = jax.block_until_ready(discriminator_forward(x, params))
    assert out.shape == (batch, 1)

    ref_exact = reference_forward_mixed(x, params)   # same math as the kernel
    ref_f32 = reference_forward_f32(x, params)       # full-precision sanity check
    assert jnp.allclose(out, ref_exact, atol=2e-3, rtol=2e-3), "mismatch vs mixed ref"
    assert jnp.allclose(out, ref_f32, atol=5e-2, rtol=5e-2), "mismatch vs f32 ref"

    print("KERNEL_OK")
</pallas_src>

<mosaic_0001>
module attributes {stable_mosaic.version = 11 : i64} {
  func.func @discriminator_kernel(%arg0: i32, %arg1: memref<168x512xf32, #tpu.memory_space<vmem>>, %arg2: memref<84x168xbf16, #tpu.memory_space<vmem>>, %arg3: memref<84x1xf32, #tpu.memory_space<vmem>>, %arg4: memref<42x84xbf16, #tpu.memory_space<vmem>>, %arg5: memref<42x1xf32, #tpu.memory_space<vmem>>, %arg6: memref<42x42xbf16, #tpu.memory_space<vmem>>, %arg7: memref<42x1xf32, #tpu.memory_space<vmem>>, %arg8: memref<21x42xbf16, #tpu.memory_space<vmem>>, %arg9: memref<21x1xf32, #tpu.memory_space<vmem>>, %arg10: memref<10x21xbf16, #tpu.memory_space<vmem>>, %arg11: memref<10x1xf32, #tpu.memory_space<vmem>>, %arg12: memref<10x1xf32, #tpu.memory_space<vmem>>, %arg13: memref<1x1xf32, #tpu.memory_space<vmem>>, %arg14: memref<1x512xf32, #tpu.memory_space<vmem>>) attributes {dimension_semantics = [#tpu.dimension_semantics<parallel>], iteration_bounds = array<i64: 4>, scalar_prefetch = 0 : i64, scratch_operands = 0 : i64, tpu.core_type = #tpu.core_type<tc>, window_params = [{transform_indices = @transform_0, window_bounds = array<i64: 168, 512>}, {pipeline_mode = #tpu.pipeline_mode<synchronous>, transform_indices = @transform_1, window_bounds = array<i64: 84, 168>}, {pipeline_mode = #tpu.pipeline_mode<synchronous>, transform_indices = @transform_2, window_bounds = array<i64: 84, 1>}, {pipeline_mode = #tpu.pipeline_mode<synchronous>, transform_indices = @transform_3, window_bounds = array<i64: 42, 84>}, {pipeline_mode = #tpu.pipeline_mode<synchronous>, transform_indices = @transform_4, window_bounds = array<i64: 42, 1>}, {pipeline_mode = #tpu.pipeline_mode<synchronous>, transform_indices = @transform_5, window_bounds = array<i64: 42, 42>}, {pipeline_mode = #tpu.pipeline_mode<synchronous>, transform_indices = @transform_6, window_bounds = array<i64: 42, 1>}, {pipeline_mode = #tpu.pipeline_mode<synchronous>, transform_indices = @transform_7, window_bounds = array<i64: 21, 42>}, {pipeline_mode = #tpu.pipeline_mode<synchronous>, transform_indices = @transform_8, window_bounds = array<i64: 21, 1>}, {pipeline_mode = #tpu.pipeline_mode<synchronous>, transform_indices = @transform_9, window_bounds = array<i64: 10, 21>}, {pipeline_mode = #tpu.pipeline_mode<synchronous>, transform_indices = @transform_10, window_bounds = array<i64: 10, 1>}, {pipeline_mode = #tpu.pipeline_mode<synchronous>, transform_indices = @transform_11, window_bounds = array<i64: 10, 1>}, {pipeline_mode = #tpu.pipeline_mode<synchronous>, transform_indices = @transform_12, window_bounds = array<i64: 1, 1>}, {transform_indices = @transform_13, window_bounds = array<i64: 1, 512>}]} {
    %c0 = arith.constant 0 : index
    %c0_0 = arith.constant 0 : index
    %0 = vector.load %arg1[%c0, %c0_0] : memref<168x512xf32, #tpu.memory_space<vmem>>, vector<168x512xf32>
    %c0_1 = arith.constant 0 : index
    %c0_2 = arith.constant 0 : index
    %1 = vector.load %arg2[%c0_1, %c0_2] : memref<84x168xbf16, #tpu.memory_space<vmem>>, vector<84x168xbf16>
    %2 = arith.truncf %0 : vector<168x512xf32> to vector<168x512xbf16>
    %cst = arith.constant dense<0.000000e+00> : vector<84x512xf32>
    %3 = tpu.matmul %1, %2, %cst {dimension_numbers = #tpu.dot_dimension_numbers<[1], [0], [0], [1], [0, 0, 1, 1], [], []>} : vector<84x168xbf16>, vector<168x512xbf16>, vector<84x512xf32> -> vector<84x512xf32>
    %c0_3 = arith.constant 0 : index
    %c0_4 = arith.constant 0 : index
    %4 = vector.load %arg3[%c0_3, %c0_4] : memref<84x1xf32, #tpu.memory_space<vmem>>, vector<84x1xf32>
    %5 = vector.broadcast %4 : vector<84x1xf32> to vector<84x512xf32>
    %6 = arith.addf %3, %5 : vector<84x512xf32>
    %cst_5 = arith.constant 0.000000e+00 : f32
    %7 = vector.broadcast %cst_5 : f32 to vector<84x512xf32>
    %8 = arith.cmpf oge, %6, %7 : vector<84x512xf32>
    %cst_6 = arith.constant 0.00999999977 : f32
    %9 = vector.broadcast %cst_6 : f32 to vector<84x512xf32>
    %10 = arith.mulf %9, %6 : vector<84x512xf32>
    %11 = arith.select %8, %6, %10 : vector<84x512xi1>, vector<84x512xf32>
    %c0_7 = arith.constant 0 : index
    %c0_8 = arith.constant 0 : index
    %12 = vector.load %arg4[%c0_7, %c0_8] : memref<42x84xbf16, #tpu.memory_space<vmem>>, vector<42x84xbf16>
    %13 = arith.truncf %11 : vector<84x512xf32> to vector<84x512xbf16>
    %cst_9 = arith.constant dense<0.000000e+00> : vector<42x512xf32>
    %14 = tpu.matmul %12, %13, %cst_9 {dimension_numbers = #tpu.dot_dimension_numbers<[1], [0], [0], [1], [0, 0, 1, 1], [], []>} : vector<42x84xbf16>, vector<84x512xbf16>, vector<42x512xf32> -> vector<42x512xf32>
    %c0_10 = arith.constant 0 : index
    %c0_11 = arith.constant 0 : index
    %15 = vector.load %arg5[%c0_10, %c0_11] : memref<42x1xf32, #tpu.memory_space<vmem>>, vector<42x1xf32>
    %16 = vector.broadcast %15 : vector<42x1xf32> to vector<42x512xf32>
    %17 = arith.addf %14, %16 : vector<42x512xf32>
    %cst_12 = arith.constant 0.000000e+00 : f32
    %18 = vector.broadcast %cst_12 : f32 to vector<42x512xf32>
    %19 = arith.cmpf oge, %17, %18 : vector<42x512xf32>
    %cst_13 = arith.constant 0.00999999977 : f32
    %20 = vector.broadcast %cst_13 : f32 to vector<42x512xf32>
    %21 = arith.mulf %20, %17 : vector<42x512xf32>
    %22 = arith.select %19, %17, %21 : vector<42x512xi1>, vector<42x512xf32>
    %c0_14 = arith.constant 0 : index
    %c0_15 = arith.constant 0 : index
    %23 = vector.load %arg6[%c0_14, %c0_15] : memref<42x42xbf16, #tpu.memory_space<vmem>>, vector<42x42xbf16>
    %24 = arith.truncf %22 : vector<42x512xf32> to vector<42x512xbf16>
    %cst_16 = arith.constant dense<0.000000e+00> : vector<42x512xf32>
    %25 = tpu.matmul %23, %24, %cst_16 {dimension_numbers = #tpu.dot_dimension_numbers<[1], [0], [0], [1], [0, 0, 1, 1], [], []>} : vector<42x42xbf16>, vector<42x512xbf16>, vector<42x512xf32> -> vector<42x512xf32>
    %c0_17 = arith.constant 0 : index
    %c0_18 = arith.constant 0 : index
    %26 = vector.load %arg7[%c0_17, %c0_18] : memref<42x1xf32, #tpu.memory_space<vmem>>, vector<42x1xf32>
    %27 = vector.broadcast %26 : vector<42x1xf32> to vector<42x512xf32>
    %28 = arith.addf %25, %27 : vector<42x512xf32>
    %cst_19 = arith.constant 0.000000e+00 : f32
    %29 = vector.broadcast %cst_19 : f32 to vector<42x512xf32>
    %30 = arith.cmpf oge, %28, %29 : vector<42x512xf32>
    %cst_20 = arith.constant 0.00999999977 : f32
    %31 = vector.broadcast %cst_20 : f32 to vector<42x512xf32>
    %32 = arith.mulf %31, %28 : vector<42x512xf32>
    %33 = arith.select %30, %28, %32 : vector<42x512xi1>, vector<42x512xf32>
    %c0_21 = arith.constant 0 : index
    %c0_22 = arith.constant 0 : index
    %34 = vector.load %arg8[%c0_21, %c0_22] : memref<21x42xbf16, #tpu.memory_space<vmem>>, vector<21x42xbf16>
    %35 = arith.truncf %33 : vector<42x512xf32> to vector<42x512xbf16>
    %cst_23 = arith.constant dense<0.000000e+00> : vector<21x512xf32>
    %36 = tpu.matmul %34, %35, %cst_23 {dimension_numbers = #tpu.dot_dimension_numbers<[1], [0], [0], [1], [0, 0, 1, 1], [], []>} : vector<21x42xbf16>, vector<42x512xbf16>, vector<21x512xf32> -> vector<21x512xf32>
    %c0_24 = arith.constant 0 : index
    %c0_25 = arith.constant 0 : index
    %37 = vector.load %arg9[%c0_24, %c0_25] : memref<21x1xf32, #tpu.memory_space<vmem>>, vector<21x1xf32>
    %38 = vector.broadcast %37 : vector<21x1xf32> to vector<21x512xf32>
    %39 = arith.addf %36, %38 : vector<21x512xf32>
    %cst_26 = arith.constant 0.000000e+00 : f32
    %40 = vector.broadcast %cst_26 : f32 to vector<21x512xf32>
    %41 = arith.cmpf oge, %39, %40 : vector<21x512xf32>
    %cst_27 = arith.constant 0.00999999977 : f32
    %42 = vector.broadcast %cst_27 : f32 to vector<21x512xf32>
    %43 = arith.mulf %42, %39 : vector<21x512xf32>
    %44 = arith.select %41, %39, %43 : vector<21x512xi1>, vector<21x512xf32>
    %c0_28 = arith.constant 0 : index
    %c0_29 = arith.constant 0 : index
    %45 = vector.load %arg10[%c0_28, %c0_29] : memref<10x21xbf16, #tpu.memory_space<vmem>>, vector<10x21xbf16>
    %46 = arith.truncf %44 : vector<21x512xf32> to vector<21x512xbf16>
    %cst_30 = arith.constant dense<0.000000e+00> : vector<10x512xf32>
    %47 = tpu.matmul %45, %46, %cst_30 {dimension_numbers = #tpu.dot_dimension_numbers<[1], [0], [0], [1], [0, 0, 1, 1], [], []>} : vector<10x21xbf16>, vector<21x512xbf16>, vector<10x512xf32> -> vector<10x512xf32>
    %c0_31 = arith.constant 0 : index
    %c0_32 = arith.constant 0 : index
    %48 = vector.load %arg11[%c0_31, %c0_32] : memref<10x1xf32, #tpu.memory_space<vmem>>, vector<10x1xf32>
    %49 = vector.broadcast %48 : vector<10x1xf32> to vector<10x512xf32>
    %50 = arith.addf %47, %49 : vector<10x512xf32>
    %cst_33 = arith.constant 0.000000e+00 : f32
    %51 = vector.broadcast %cst_33 : f32 to vector<10x512xf32>
    %52 = arith.cmpf oge, %50, %51 : vector<10x512xf32>
    %cst_34 = arith.constant 0.00999999977 : f32
    %53 = vector.broadcast %cst_34 : f32 to vector<10x512xf32>
    %54 = arith.mulf %53, %50 : vector<10x512xf32>
    %55 = arith.select %52, %50, %54 : vector<10x512xi1>, vector<10x512xf32>
    %c0_35 = arith.constant 0 : index
    %c0_36 = arith.constant 0 : index
    %56 = vector.load %arg12[%c0_35, %c0_36] : memref<10x1xf32, #tpu.memory_space<vmem>>, vector<10x1xf32>
    %57 = vector.broadcast %56 : vector<10x1xf32> to vector<10x512xf32>
    %58 = arith.mulf %55, %57 : vector<10x512xf32>
    %cst_37 = arith.constant dense<0.000000e+00> : vector<512xf32>
    %59 = vector.multi_reduction <add>, %58, %cst_37 [0] : vector<10x512xf32> to vector<512xf32>
    %60 = vector.shape_cast %59 : vector<512xf32> to vector<1x512xf32>
    %c0_38 = arith.constant 0 : index
    %c0_39 = arith.constant 0 : index
    %61 = vector.load %arg13[%c0_38, %c0_39] : memref<1x1xf32, #tpu.memory_space<vmem>>, vector<1x1xf32>
    %62 = vector.broadcast %61 : vector<1x1xf32> to vector<1x512xf32>
    %63 = arith.addf %60, %62 : vector<1x512xf32>
    %cst_40 = arith.constant 0.000000e+00 : f32
    %64 = vector.broadcast %cst_40 : f32 to vector<1x512xf32>
    %65 = arith.cmpf oge, %63, %64 : vector<1x512xf32>
    %cst_41 = arith.constant 0.00999999977 : f32
    %66 = vector.broadcast %cst_41 : f32 to vector<1x512xf32>
    %67 = arith.mulf %66, %63 : vector<1x512xf32>
    %68 = arith.select %65, %63, %67 : vector<1x512xi1>, vector<1x512xf32>
    %c0_42 = arith.constant 0 : index
    %c0_43 = arith.constant 0 : index
    %69 = vector.load %arg14[%c0_42, %c0_43] : memref<1x512xf32, #tpu.memory_space<vmem>>, vector<1x512xf32>
    tpu.vector_store %arg14[%c0_42, %c0_43], %68 {strides = array<i32>} : memref<1x512xf32, #tpu.memory_space<vmem>>, vector<1x512xf32>,
    return
  }
  func.func @transform_0(%arg0: i32) -> (i32, i32) {
    %c0_i32 = arith.constant 0 : i32
    %c0_i32_0 = arith.constant 0 : i32
    return %c0_i32, %arg0 : i32, i32
  }
  func.func @transform_1(%arg0: i32) -> (i32, i32) {
    %c0_i32 = arith.constant 0 : i32
    %c0_i32_0 = arith.constant 0 : i32
    %c0_i32_1 = arith.constant 0 : i32
    return %c0_i32, %c0_i32_0 : i32, i32
  }
  func.func @transform_2(%arg0: i32) -> (i32, i32) {
    %c0_i32 = arith.constant 0 : i32
    %c0_i32_0 = arith.constant 0 : i32
    %c0_i32_1 = arith.constant 0 : i32
    return %c0_i32, %c0_i32_0 : i32, i32
  }
  func.func @transform_3(%arg0: i32) -> (i32, i32) {
    %c0_i32 = arith.constant 0 : i32
    %c0_i32_0 = arith.constant 0 : i32
    %c0_i32_1 = arith.constant 0 : i32
    return %c0_i32, %c0_i32_0 : i32, i32
  }
  func.func @transform_4(%arg0: i32) -> (i32, i32) {
    %c0_i32 = arith.constant 0 : i32
    %c0_i32_0 = arith.constant 0 : i32
    %c0_i32_1 = arith.constant 0 : i32
    return %c0_i32, %c0_i32_0 : i32, i32
  }
  func.func @transform_5(%arg0: i32) -> (i32, i32) {
    %c0_i32 = arith.constant 0 : i32
    %c0_i32_0 = arith.constant 0 : i32
    %c0_i32_1 = arith.constant 0 : i32
    return %c0_i32, %c0_i32_0 : i32, i32
  }
  func.func @transform_6(%arg0: i32) -> (i32, i32) {
    %c0_i32 = arith.constant 0 : i32
    %c0_i32_0 = arith.constant 0 : i32
    %c0_i32_1 = arith.constant 0 : i32
    return %c0_i32, %c0_i32_0 : i32, i32
  }
  func.func @transform_7(%arg0: i32) -> (i32, i32) {
    %c0_i32 = arith.constant 0 : i32
    %c0_i32_0 = arith.constant 0 : i32
    %c0_i32_1 = arith.constant 0 : i32
    return %c0_i32, %c0_i32_0 : i32, i32
  }
  func.func @transform_8(%arg0: i32) -> (i32, i32) {
    %c0_i32 = arith.constant 0 : i32
    %c0_i32_0 = arith.constant 0 : i32
    %c0_i32_1 = arith.constant 0 : i32
    return %c0_i32, %c0_i32_0 : i32, i32
  }
  func.func @transform_9(%arg0: i32) -> (i32, i32) {
    %c0_i32 = arith.constant 0 : i32
    %c0_i32_0 = arith.constant 0 : i32
    %c0_i32_1 = arith.constant 0 : i32
    return %c0_i32, %c0_i32_0 : i32, i32
  }
  func.func @transform_10(%arg0: i32) -> (i32, i32) {
    %c0_i32 = arith.constant 0 : i32
    %c0_i32_0 = arith.constant 0 : i32
    %c0_i32_1 = arith.constant 0 : i32
    return %c0_i32, %c0_i32_0 : i32, i32
  }
  func.func @transform_11(%arg0: i32) -> (i32, i32) {
    %c0_i32 = arith.constant 0 : i32
    %c0_i32_0 = arith.constant 0 : i32
    %c0_i32_1 = arith.constant 0 : i32
    return %c0_i32, %c0_i32_0 : i32, i32
  }
  func.func @transform_12(%arg0: i32) -> (i32, i32) {
    %c0_i32 = arith.constant 0 : i32
    %c0_i32_0 = arith.constant 0 : i32
    %c0_i32_1 = arith.constant 0 : i32
    return %c0_i32, %c0_i32_0 : i32, i32
  }
  func.func @transform_13(%arg0: i32) -> (i32, i32) {
    %c0_i32 = arith.constant 0 : i32
    %c0_i32_0 = arith.constant 0 : i32
    return %c0_i32, %arg0 : i32, i32
  }
}

</mosaic_0001>

<llo_original>
// kernel: tpu_custom_call.1
$region0: #{tpu_custom_call.1}
  #allocation0 [shape = 'u32[]', space=smem, size = 0x4, offset = 0x4, fixed_abs, tag = 'smem constant byte address 0x4 - core index']
  #allocation1 [shape = 'u32[72,128]{1,0:T(1,128)}', space=vmem, size = 0x9000, scoped, tag = 'internal scratch']
  #allocation2 [shape = 'f32[1,1]{1,0:T(1,128)S(1)}', space=vmem, size = 0x200, scoped, tag = 'scoped memory for tpu_custom_call.1']
  %s0 = inlined_call_operand.hbm [shape: f32[168,2000], index: 0, kind: input, shape index: {}]
  %s1 = inlined_call_operand.vmem [shape: bf16[84,168], index: 1, kind: input, shape index: {}]
  %s2 = inlined_call_operand.vmem [shape: f32[84,1], index: 2, kind: input, shape index: {}]
  %s3 = inlined_call_operand.hbm [shape: bf16[42,84], index: 3, kind: input, shape index: {}]
  %s4 = inlined_call_operand.vmem [shape: f32[42,1], index: 4, kind: input, shape index: {}]
  %s5 = inlined_call_operand.hbm [shape: bf16[42,42], index: 5, kind: input, shape index: {}]
  %s6 = inlined_call_operand.vmem [shape: f32[42,1], index: 6, kind: input, shape index: {}]
  %s7 = inlined_call_operand.hbm [shape: bf16[21,42], index: 7, kind: input, shape index: {}]
  %s8 = inlined_call_operand.vmem [shape: f32[21,1], index: 8, kind: input, shape index: {}]
  %s9 = inlined_call_operand.hbm [shape: bf16[10,21], index: 9, kind: input, shape index: {}]
  %s10 = inlined_call_operand.vmem [shape: f32[10,1], index: 10, kind: input, shape index: {}]
  %s11 = inlined_call_operand.vmem [shape: f32[10,1], index: 11, kind: input, shape index: {}]
  %s12 = inlined_call_operand.<no memory space> [shape: f32[1,1], index: 12, kind: input, shape index: {}]
  %s13 = inlined_call_operand.hbm [shape: f32[1,2000], index: 13, kind: output, shape index: {}]
  %s14 = sld [smem:[#allocation0]]
  $region105: #{tpu_custom_call.1} parent=0
    _
  %s16 = ssub.s32 1, %s14
  %s17 = scalar_select 0, %s16, %s14
  %v18 = vstv %s12
  %19 = vst [vmem:[#allocation2] sm:$0x1] %v18
  $region1: #{tpu_custom_call.1} parent=0
    #allocation3 [shape = 'u8[688128]{0}', space=vmem, size = 0xa8000, scoped, tag = 'input window, operand 0']
    #allocation4 [shape = 's32[2]{0}', space=sflag, size = 0x8, scoped, tag = 'scoped memory for tpu_custom_call.1']
    #allocation5 [shape = 's32[2]{0}', space=sflag, size = 0x8, scoped, tag = 'scoped memory for tpu_custom_call.1']
    #allocation6 [shape = 'u8[12288]{0}', space=vmem, size = 0x3000, scoped, tag = 'input window, operand 3, single buffered']
    #allocation7 [shape = 's32[1]{0}', space=sflag, size = 0x4, scoped, tag = 'scoped memory for tpu_custom_call.1']
    #allocation8 [shape = 'u8[12288]{0}', space=vmem, size = 0x3000, scoped, tag = 'input window, operand 5, single buffered']
    #allocation9 [shape = 'u8[6144]{0}', space=vmem, size = 0x1800, scoped, tag = 'input window, operand 7, single buffered']
    #allocation10 [shape = 's32[1]{0}', space=sflag, size = 0x4, scoped, tag = 'scoped memory for tpu_custom_call.1']
    #allocation11 [shape = 'u8[4096]{0}', space=vmem, size = 0x1000, scoped, tag = 'input window, operand 9, single buffered']
    #allocation12 [shape = 'u8[4096]{0}', space=vmem, size = 0x1000, scoped, tag = 'output window, operand 0']
    %20 = vsyncpa [#allocation4], 0
    %s21 = scalar_lea.sflag [#allocation4], 1
    %22 = vsyncpa %s21, 0
    %23 = vsyncpa [#allocation7], 0
    %24 = vsyncpa [#allocation10], 0
    %25 = vsyncpa [#allocation5], 0
    %s26 = scalar_lea.sflag [#allocation5], 1
    %27 = vsyncpa %s26, 0
    loop: start=0, step=1, limit=6
    $region2: #{tpu_custom_call.1} parent=1 // loop_pre_header
      _
    $region3: #{tpu_custom_call.1} parent=1 // loop_header
      %s29 = sphi 0, %s33
      %p30 = scmp.ge.s32.totalorder %s29, 6
      %s39 = sphi 0, %s41
      %s42 = sphi 0, %s39
      %s43 = sphi 0, %s42
      %s59 = sphi 0, %s43
      %s63 = sphi 0, %s63
      %s65 = sphi 0, %s63
      %s66 = sphi 0, %s65
      %s80 = sphi 0, %s66
      %s84 = sphi 0, %s84
      %s86 = sphi 0, %s84
      %s87 = sphi 0, %s86
      %s101 = sphi 0, %s87
      %s105 = sphi 0, %s105
      %s107 = sphi 0, %s105
      %s108 = sphi 0, %s107
      %s122 = sphi 0, %s108
      %s126 = sphi 0, %s126
      %s128 = sphi 0, %s126
      %s129 = sphi 0, %s128
      %s143 = sphi 0, %s129
      %s147 = sphi 0, %s147
      %s149 = sphi 0, %s147
      %s150 = sphi 0, %s149
      %s164 = sphi 0, %s150
      %s168 = sphi 0, %s168
      %s170 = sphi 0, %s168
      %s171 = sphi 0, %s170
      %s185 = sphi 0, %s171
      %s189 = sphi 0, %s189
      %s191 = sphi 0, %s189
      %s192 = sphi 0, %s191
      %s206 = sphi 0, %s192
      %s210 = sphi 0, %s210
      %s212 = sphi 0, %s210
      %s213 = sphi 0, %s212
      %s227 = sphi 0, %s213
      %s231 = sphi 0, %s231
      %s233 = sphi 0, %s231
      %s234 = sphi 0, %s233
      %s248 = sphi 0, %s234
      %s252 = sphi 0, %s252
      %s254 = sphi 0, %s252
      %s255 = sphi 0, %s254
      %s269 = sphi 0, %s255
      %s273 = sphi 0, %s273
      %s275 = sphi 0, %s273
      %s276 = sphi 0, %s275
      %s290 = sphi 0, %s276
      %s294 = sphi 0, %s294
      %s296 = sphi 0, %s294
      %s297 = sphi 0, %s296
      %s311 = sphi 0, %s297
      %s317 = sphi 0, %s319
      %s320 = sphi 0, %s317
      %s321 = sphi 0, %s320
      %s337 = sphi 0, %s321
    $region4: #{tpu_custom_call.1} parent=1 // loop_header_branch
      %32 = sbr.rel (%p30) target = $region8
    $region5: #{tpu_custom_call.1} parent=1 // loop_body
      %s34 = ssub.s32 %s29, 1
      %s35 = ssub.s32 %s29, 2
      %s36 = sadd.s32 %s29, 1
      %s37 = ssub.s32 %s29, %s36
      %p38 = scmp.eq.s32.totalorder %s37, 0
      %s40 = sadd.s32 %s39, 1
      %s41 = scalar_select %p38, %s39, %s40
      %p44 = pneg %p38
      %p45 = scmp.eq.s32.totalorder %s29, 3
      %p46 = por %p44, %p45
      %p47 = scmp.ne.s32.totalorder %s39, %s42
      %p48 = scmp.eq.s32.totalorder %s29, 0
      %p49 = por %p47, %p48
      %p50 = scmp.ne.s32.totalorder %s39, %s42
      %p51 = scmp.eq.s32.totalorder %s34, 3
      %p52 = por %p50, %p51
      %p53 = scmp.ne.s32.totalorder %s42, %s43
      %p54 = scmp.eq.s32.totalorder %s34, 0
      %p55 = por %p53, %p54
      %p56 = scmp.ne.s32.totalorder %s42, %s43
      %p57 = scmp.eq.s32.totalorder %s35, 3
      %p58 = por %p56, %p57
      %p60 = scmp.ne.s32.totalorder %s43, %s59
      %p61 = scmp.eq.s32.totalorder %s35, 0
      %p62 = por %p60, %p61
      %s64 = sadd.s32 %s63, 1
      %p67 = scmp.eq.s32.totalorder %s29, 3
      %p68 = scmp.ne.s32.totalorder %s63, %s65
      %p69 = scmp.eq.s32.totalorder %s29, 0
      %p70 = por %p68, %p69
      %p71 = scmp.ne.s32.totalorder %s63, %s65
      %p72 = scmp.eq.s32.totalorder %s34, 3
      %p73 = por %p71, %p72
      %p74 = scmp.ne.s32.totalorder %s65, %s66
      %p75 = scmp.eq.s32.totalorder %s34, 0
      %p76 = por %p74, %p75
      %p77 = scmp.ne.s32.totalorder %s65, %s66
      %p78 = scmp.eq.s32.totalorder %s35, 3
      %p79 = por %p77, %p78
      %p81 = scmp.ne.s32.totalorder %s66, %s80
      %p82 = scmp.eq.s32.totalorder %s35, 0
      %p83 = por %p81, %p82
      %s85 = sadd.s32 %s84, 1
      %p88 = scmp.eq.s32.totalorder %s29, 3
      %p89 = scmp.ne.s32.totalorder %s84, %s86
      %p90 = scmp.eq.s32.totalorder %s29, 0
      %p91 = por %p89, %p90
      %p92 = scmp.ne.s32.totalorder %s84, %s86
      %p93 = scmp.eq.s32.totalorder %s34, 3
      %p94 = por %p92, %p93
      %p95 = scmp.ne.s32.totalorder %s86, %s87
      %p96 = scmp.eq.s32.totalorder %s34, 0
      %p97 = por %p95, %p96
      %p98 = scmp.ne.s32.totalorder %s86, %s87
      %p99 = scmp.eq.s32.totalorder %s35, 3
      %p100 = por %p98, %p99
      %p102 = scmp.ne.s32.totalorder %s87, %s101
      %p103 = scmp.eq.s32.totalorder %s35, 0
      %p104 = por %p102, %p103
      %s106 = sadd.s32 %s105, 1
      %p109 = scmp.eq.s32.totalorder %s29, 3
      %p110 = scmp.ne.s32.totalorder %s105, %s107
      %p111 = scmp.eq.s32.totalorder %s29, 0
      %p112 = por %p110, %p111
      %p113 = scmp.ne.s32.totalorder %s105, %s107
      %p114 = scmp.eq.s32.totalorder %s34, 3
      %p115 = por %p113, %p114
      %p116 = scmp.ne.s32.totalorder %s107, %s108
      %p117 = scmp.eq.s32.totalorder %s34, 0
      %p118 = por %p116, %p117
      %p119 = scmp.ne.s32.totalorder %s107, %s108
      %p120 = scmp.eq.s32.totalorder %s35, 3
      %p121 = por %p119, %p120
      %p123 = scmp.ne.s32.totalorder %s108, %s122
      %p124 = scmp.eq.s32.totalorder %s35, 0
      %p125 = por %p123, %p124
      %s127 = sadd.s32 %s126, 1
      %p130 = scmp.eq.s32.totalorder %s29, 3
      %p131 = scmp.ne.s32.totalorder %s126, %s128
      %p132 = scmp.eq.s32.totalorder %s29, 0
      %p133 = por %p131, %p132
      %p134 = scmp.ne.s32.totalorder %s126, %s128
      %p135 = scmp.eq.s32.totalorder %s34, 3
      %p136 = por %p134, %p135
      %p137 = scmp.ne.s32.totalorder %s128, %s129
      %p138 = scmp.eq.s32.totalorder %s34, 0
      %p139 = por %p137, %p138
      %p140 = scmp.ne.s32.totalorder %s128, %s129
      %p141 = scmp.eq.s32.totalorder %s35, 3
      %p142 = por %p140, %p141
      %p144 = scmp.ne.s32.totalorder %s129, %s143
      %p145 = scmp.eq.s32.totalorder %s35, 0
      %p146 = por %p144, %p145
      %s148 = sadd.s32 %s147, 1
      %p151 = scmp.eq.s32.totalorder %s29, 3
      %p152 = scmp.ne.s32.totalorder %s147, %s149
      %p153 = scmp.eq.s32.totalorder %s29, 0
      %p154 = por %p152, %p153
      %p155 = scmp.ne.s32.totalorder %s147, %s149
      %p156 = scmp.eq.s32.totalorder %s34, 3
      %p157 = por %p155, %p156
      %p158 = scmp.ne.s32.totalorder %s149, %s150
      %p159 = scmp.eq.s32.totalorder %s34, 0
      %p160 = por %p158, %p159
      %p161 = scmp.ne.s32.totalorder %s149, %s150
      %p162 = scmp.eq.s32.totalorder %s35, 3
      %p163 = por %p161, %p162
      %p165 = scmp.ne.s32.totalorder %s150, %s164
      %p166 = scmp.eq.s32.totalorder %s35, 0
      %p167 = por %p165, %p166
      %s169 = sadd.s32 %s168, 1
      %p172 = scmp.eq.s32.totalorder %s29, 3
      %p173 = scmp.ne.s32.totalorder %s168, %s170
      %p174 = scmp.eq.s32.totalorder %s29, 0
      %p175 = por %p173, %p174
      %p176 = scmp.ne.s32.totalorder %s168, %s170
      %p177 = scmp.eq.s32.totalorder %s34, 3
      %p178 = por %p176, %p177
      %p179 = scmp.ne.s32.totalorder %s170, %s171
      %p180 = scmp.eq.s32.totalorder %s34, 0
      %p181 = por %p179, %p180
      %p182 = scmp.ne.s32.totalorder %s170, %s171
      %p183 = scmp.eq.s32.totalorder %s35, 3
      %p184 = por %p182, %p183
      %p186 = scmp.ne.s32.totalorder %s171, %s185
      %p187 = scmp.eq.s32.totalorder %s35, 0
      %p188 = por %p186, %p187
      %s190 = sadd.s32 %s189, 1
      %p193 = scmp.eq.s32.totalorder %s29, 3
      %p194 = scmp.ne.s32.totalorder %s189, %s191
      %p195 = scmp.eq.s32.totalorder %s29, 0
      %p196 = por %p194, %p195
      %p197 = scmp.ne.s32.totalorder %s189, %s191
      %p198 = scmp.eq.s32.totalorder %s34, 3
      %p199 = por %p197, %p198
      %p200 = scmp.ne.s32.totalorder %s191, %s192
      %p201 = scmp.eq.s32.totalorder %s34, 0
      %p202 = por %p200, %p201
      %p203 = scmp.ne.s32.totalorder %s191, %s192
      %p204 = scmp.eq.s32.totalorder %s35, 3
      %p205 = por %p203, %p204
      %p207 = scmp.ne.s32.totalorder %s192, %s206
      %p208 = scmp.eq.s32.totalorder %s35, 0
      %p209 = por %p207, %p208
      %s211 = sadd.s32 %s210, 1
      %p214 = scmp.eq.s32.totalorder %s29, 3
      %p215 = scmp.ne.s32.totalorder %s210, %s212
      %p216 = scmp.eq.s32.totalorder %s29, 0
      %p217 = por %p215, %p216
      %p218 = scmp.ne.s32.totalorder %s210, %s212
      %p219 = scmp.eq.s32.totalorder %s34, 3
      %p220 = por %p218, %p219
      %p221 = scmp.ne.s32.totalorder %s212, %s213
      %p222 = scmp.eq.s32.totalorder %s34, 0
      %p223 = por %p221, %p222
      %p224 = scmp.ne.s32.totalorder %s212, %s213
      %p225 = scmp.eq.s32.totalorder %s35, 3
      %p226 = por %p224, %p225
      %p228 = scmp.ne.s32.totalorder %s213, %s227
      %p229 = scmp.eq.s32.totalorder %s35, 0
      %p230 = por %p228, %p229
      %s232 = sadd.s32 %s231, 1
      %p235 = scmp.eq.s32.totalorder %s29, 3
      %p236 = scmp.ne.s32.totalorder %s231, %s233
      %p237 = scmp.eq.s32.totalorder %s29, 0
      %p238 = por %p236, %p237
      %p239 = scmp.ne.s32.totalorder %s231, %s233
      %p240 = scmp.eq.s32.totalorder %s34, 3
      %p241 = por %p239, %p240
      %p242 = scmp.ne.s32.totalorder %s233, %s234
      %p243 = scmp.eq.s32.totalorder %s34, 0
      %p244 = por %p242, %p243
      %p245 = scmp.ne.s32.totalorder %s233, %s234
      %p246 = scmp.eq.s32.totalorder %s35, 3
      %p247 = por %p245, %p246
      %p249 = scmp.ne.s32.totalorder %s234, %s248
      %p250 = scmp.eq.s32.totalorder %s35, 0
      %p251 = por %p249, %p250
      %s253 = sadd.s32 %s252, 1
      %p256 = scmp.eq.s32.totalorder %s29, 3
      %p257 = scmp.ne.s32.totalorder %s252, %s254
      %p258 = scmp.eq.s32.totalorder %s29, 0
      %p259 = por %p257, %p258
      %p260 = scmp.ne.s32.totalorder %s252, %s254
      %p261 = scmp.eq.s32.totalorder %s34, 3
      %p262 = por %p260, %p261
      %p263 = scmp.ne.s32.totalorder %s254, %s255
      %p264 = scmp.eq.s32.totalorder %s34, 0
      %p265 = por %p263, %p264
      %p266 = scmp.ne.s32.totalorder %s254, %s255
      %p267 = scmp.eq.s32.totalorder %s35, 3
      %p268 = por %p266, %p267
      %p270 = scmp.ne.s32.totalorder %s255, %s269
      %p271 = scmp.eq.s32.totalorder %s35, 0
      %p272 = por %p270, %p271
      %s274 = sadd.s32 %s273, 1
      %p277 = scmp.eq.s32.totalorder %s29, 3
      %p278 = scmp.ne.s32.totalorder %s273, %s275
      %p279 = scmp.eq.s32.totalorder %s29, 0
      %p280 = por %p278, %p279
      %p281 = scmp.ne.s32.totalorder %s273, %s275
      %p282 = scmp.eq.s32.totalorder %s34, 3
      %p283 = por %p281, %p282
      %p284 = scmp.ne.s32.totalorder %s275, %s276
      %p285 = scmp.eq.s32.totalorder %s34, 0
      %p286 = por %p284, %p285
      %p287 = scmp.ne.s32.totalorder %s275, %s276
      %p288 = scmp.eq.s32.totalorder %s35, 3
      %p289 = por %p287, %p288
      %p291 = scmp.ne.s32.totalorder %s276, %s290
      %p292 = scmp.eq.s32.totalorder %s35, 0
      %p293 = por %p291, %p292
      %s295 = sadd.s32 %s294, 1
      %p298 = scmp.eq.s32.totalorder %s29, 3
      %p299 = scmp.ne.s32.totalorder %s294, %s296
      %p300 = scmp.eq.s32.totalorder %s29, 0
      %p301 = por %p299, %p300
      %p302 = scmp.ne.s32.totalorder %s294, %s296
      %p303 = scmp.eq.s32.totalorder %s34, 3
      %p304 = por %p302, %p303
      %p305 = scmp.ne.s32.totalorder %s296, %s297
      %p306 = scmp.eq.s32.totalorder %s34, 0
      %p307 = por %p305, %p306
      %p308 = scmp.ne.s32.totalorder %s296, %s297
      %p309 = scmp.eq.s32.totalorder %s35, 3
      %p310 = por %p308, %p309
      %p312 = scmp.ne.s32.totalorder %s297, %s311
      %p313 = scmp.eq.s32.totalorder %s35, 0
      %p314 = por %p312, %p313
      %s315 = ssub.s32 %s29, %s36
      %p316 = scmp.eq.s32.totalorder %s315, 0
      %s318 = sadd.s32 %s317, 1
      %s319 = scalar_select %p316, %s317, %s318
      %p322 = pneg %p316
      %p323 = scmp.eq.s32.totalorder %s29, 3
      %p324 = por %p322, %p323
      %p325 = scmp.ne.s32.totalorder %s317, %s320
      %p326 = scmp.eq.s32.totalorder %s29, 0
      %p327 = por %p325, %p326
      %p328 = scmp.ne.s32.totalorder %s317, %s320
      %p329 = scmp.eq.s32.totalorder %s34, 3
      %p330 = por %p328, %p329
      %p331 = scmp.ne.s32.totalorder %s320, %s321
      %p332 = scmp.eq.s32.totalorder %s34, 0
      %p333 = por %p331, %p332
      %p334 = scmp.ne.s32.totalorder %s320, %s321
      %p335 = scmp.eq.s32.totalorder %s35, 3
      %p336 = por %p334, %p335
      %p338 = scmp.ne.s32.totalorder %s321, %s337
      %p339 = scmp.eq.s32.totalorder %s35, 0
      %p340 = por %p338, %p339
      %p341 = scmp.le.s32.totalorder 1, %s29
      %p342 = scmp.lt.s32.totalorder %s29, 5
      %p343 = pnand %p341, %p342
      %p344 = pneg %p343
      // Predicated region
      $region9: #{tpu_custom_call.1} parent=5 // pred_check
        _
      $region10: #{tpu_custom_call.1} parent=5 // pred_check_branch
        %346 = sbr.rel (%p343) target = $region12
      $region11: #{tpu_custom_call.1} parent=5 // pred_region
        %s347 = ssub.s32 %s29, 1
        // Predicated region
        $region13: #{tpu_custom_call.1} parent=11 // pred_check
          %p348 = pneg %p76
        $region14: #{tpu_custom_call.1} parent=11 // pred_check_branch
          %350 = sbr.rel (%p348) target = $region16
        $region15: #{tpu_custom_call.1} parent=11 // pred_region
          _
        $region16: #{tpu_custom_call.1} parent=11 // pred_fallthru
          _
        // Predicated region
        $region17: #{tpu_custom_call.1} parent=11 // pred_check
          %p351 = pneg %p97
        $region18: #{tpu_custom_call.1} parent=11 // pred_check_branch
          %353 = sbr.rel (%p351) target = $region20
        $region19: #{tpu_custom_call.1} parent=11 // pred_region
          _
        $region20: #{tpu_custom_call.1} parent=11 // pred_fallthru
          _
        // Predicated region
        $region21: #{tpu_custom_call.1} parent=11 // pred_check
          %p354 = pneg %p118
        $region22: #{tpu_custom_call.1} parent=11 // pred_check_branch
          %356 = sbr.rel (%p354) target = $region24
        $region23: #{tpu_custom_call.1} parent=11 // pred_region
          %358 = vsyncadd [#allocation7], 0
          %s359 = sshll.u32 %s3, 4
          %s360 = int_to_ptr.hbm [resolvable:$true] %s359
          %s361 = sshll.u32 [#allocation6], 4
          %s362 = int_to_ptr.vmem [resolvable:$true] %s361
          %367 = dma.hbm_to_vmem [thread:$0]  %s360, 384, %s362, [#allocation7], 64, 64, 4
        $region24: #{tpu_custom_call.1} parent=11 // pred_fallthru
          _
        // Predicated region
        $region25: #{tpu_custom_call.1} parent=11 // pred_check
          %p368 = pneg %p139
        $region26: #{tpu_custom_call.1} parent=11 // pred_check_branch
          %370 = sbr.rel (%p368) target = $region28
        $region27: #{tpu_custom_call.1} parent=11 // pred_region
          _
        $region28: #{tpu_custom_call.1} parent=11 // pred_fallthru
          _
        // Predicated region
        $region29: #{tpu_custom_call.1} parent=11 // pred_check
          %p371 = pneg %p160
        $region30: #{tpu_custom_call.1} parent=11 // pred_check_branch
          %373 = sbr.rel (%p371) target = $region32
        $region31: #{tpu_custom_call.1} parent=11 // pred_region
          %375 = vsyncadd [#allocation7], 0
          %s376 = sshll.u32 %s5, 4
          %s377 = int_to_ptr.hbm [resolvable:$true] %s376
          %s378 = sshll.u32 [#allocation8], 4
          %s379 = int_to_ptr.vmem [resolvable:$true] %s378
          %384 = dma.hbm_to_vmem [thread:$0]  %s377, 384, %s379, [#allocation7], 64, 64, 4
        $region32: #{tpu_custom_call.1} parent=11 // pred_fallthru
          _
        // Predicated region
        $region33: #{tpu_custom_call.1} parent=11 // pred_check
          %p385 = pneg %p181
        $region34: #{tpu_custom_call.1} parent=11 // pred_check_branch
          %387 = sbr.rel (%p385) target = $region36
        $region35: #{tpu_custom_call.1} parent=11 // pred_region
          _
        $region36: #{tpu_custom_call.1} parent=11 // pred_fallthru
          _
        // Predicated region
        $region37: #{tpu_custom_call.1} parent=11 // pred_check
          %p388 = pneg %p202
        $region38: #{tpu_custom_call.1} parent=11 // pred_check_branch
          %390 = sbr.rel (%p388) target = $region40
        $region39: #{tpu_custom_call.1} parent=11 // pred_region
          %392 = vsyncadd [#allocation10], 0
          %s393 = sshll.u32 %s7, 4
          %s394 = int_to_ptr.hbm [resolvable:$true] %s393
          %s395 = sshll.u32 [#allocation9], 4
          %s396 = int_to_ptr.vmem [resolvable:$true] %s395
          %401 = dma.hbm_to_vmem [thread:$0]  %s394, 192, %s396, [#allocation10], 64, 64, 4
        $region40: #{tpu_custom_call.1} parent=11 // pred_fallthru
          _
        // Predicated region
        $region41: #{tpu_custom_call.1} parent=11 // pred_check
          %p402 = pneg %p223
        $region42: #{tpu_custom_call.1} parent=11 // pred_check_branch
          %404 = sbr.rel (%p402) target = $region44
        $region43: #{tpu_custom_call.1} parent=11 // pred_region
          _
        $region44: #{tpu_custom_call.1} parent=11 // pred_fallthru
          _
        // Predicated region
        $region45: #{tpu_custom_call.1} parent=11 // pred_check
          %p405 = pneg %p244
        $region46: #{tpu_custom_call.1} parent=11 // pred_check_branch
          %407 = sbr.rel (%p405) target = $region48
        $region47: #{tpu_custom_call.1} parent=11 // pred_region
          %409 = vsyncadd [#allocation10], 0
          %s410 = sshll.u32 %s9, 4
          %s411 = int_to_ptr.hbm [resolvable:$true] %s410
          %s412 = sshll.u32 [#allocation11], 4
          %s413 = int_to_ptr.vmem [resolvable:$true] %s412
          %418 = dma.hbm_to_vmem [thread:$0]  %s411, 128, %s413, [#allocation10], 64, 64, 4
        $region48: #{tpu_custom_call.1} parent=11 // pred_fallthru
          _
        // Predicated region
        $region49: #{tpu_custom_call.1} parent=11 // pred_check
          %p419 = pneg %p265
        $region50: #{tpu_custom_call.1} parent=11 // pred_check_branch
          %421 = sbr.rel (%p419) target = $region52
        $region51: #{tpu_custom_call.1} parent=11 // pred_region
          _
        $region52: #{tpu_custom_call.1} parent=11 // pred_fallthru
          _
        // Predicated region
        $region53: #{tpu_custom_call.1} parent=11 // pred_check
          %p422 = pneg %p286
        $region54: #{tpu_custom_call.1} parent=11 // pred_check_branch
          %424 = sbr.rel (%p422) target = $region56
        $region55: #{tpu_custom_call.1} parent=11 // pred_region
          _
        $region56: #{tpu_custom_call.1} parent=11 // pred_fallthru
          _
        // Predicated region
        $region57: #{tpu_custom_call.1} parent=11 // pred_check
          %p425 = pneg %p307
        $region58: #{tpu_custom_call.1} parent=11 // pred_check_branch
          %427 = sbr.rel (%p425) target = $region60
        $region59: #{tpu_custom_call.1} parent=11 // pred_region
          _
        $region60: #{tpu_custom_call.1} parent=11 // pred_fallthru
          _
      $region12: #{tpu_custom_call.1} parent=5 // pred_fallthru
        _
      %p428 = scmp.lt.s32.totalorder %s29, 4
      // Predicated region
      $region61: #{tpu_custom_call.1} parent=5 // pred_check
        %p429 = pneg %p428
      $region62: #{tpu_custom_call.1} parent=5 // pred_check_branch
        %431 = sbr.rel (%p429) target = $region64
      $region63: #{tpu_custom_call.1} parent=5 // pred_region
        // Predicated region
        $region65: #{tpu_custom_call.1} parent=63 // pred_check
          %p432 = pneg %p49
        $region66: #{tpu_custom_call.1} parent=63 // pred_check_branch
          %434 = sbr.rel (%p432) target = $region68
        $region67: #{tpu_custom_call.1} parent=63 // pred_region
          %s435 = sand.u32 %s39, 1
          %s436 = scalar_lea.sflag [#allocation4], %s435
          %s437 = sand.u32 %s39, 1
          %s438 = smul.addr %s437, 672
          %s439 = scalar_lea.vmem [#allocation3], %s438
          %s440 = smul.u32 4, %s29
          %442 = vsyncadd %s436, 0
          %s443 = smul.addr %s440, 8
          %s444 = scalar_lea.hbm %s0, %s443
          %s445 = sshll.u32 %s444, 4
          %s446 = int_to_ptr.hbm [resolvable:$true] %s445
          %s447 = sshll.u32 %s439, 4
          %s448 = int_to_ptr.vmem [resolvable:$true] %s447
          %453 = dma.hbm_to_vmem [thread:$0]  %s446, 10752, %s448, %s436, 2048, 512, 32
        $region68: #{tpu_custom_call.1} parent=63 // pred_fallthru
          _
      $region64: #{tpu_custom_call.1} parent=5 // pred_fallthru
        _
      %p454 = scmp.le.s32.totalorder 1, %s29
      %p455 = scmp.lt.s32.totalorder %s29, 5
      %p456 = pnand %p454, %p455
      %p457 = pneg %p456
      // Predicated region
      $region69: #{tpu_custom_call.1} parent=5 // pred_check
        _
      $region70: #{tpu_custom_call.1} parent=5 // pred_check_branch
        %459 = sbr.rel (%p456) target = $region72
      $region71: #{tpu_custom_call.1} parent=5 // pred_region
        %s460 = ssub.s32 %s29, 1
        %s461 = sand.u32 %s42, 1
        %s462 = scalar_lea.sflag [#allocation4], %s461
        %s463 = sand.u32 %s42, 1
        %s464 = smul.addr %s463, 672
        %s465 = scalar_lea.vmem [#allocation3], %s464
        // Predicated region
        $region73: #{tpu_custom_call.1} parent=71 // pred_check
          %p466 = pneg %p55
        $region74: #{tpu_custom_call.1} parent=71 // pred_check_branch
          %468 = sbr.rel (%p466) target = $region76
        $region75: #{tpu_custom_call.1} parent=71 // pred_region
          %470 = dma.done %s462, 10752
        $region76: #{tpu_custom_call.1} parent=71 // pred_fallthru
          _
        // Predicated region
        $region77: #{tpu_custom_call.1} parent=71 // pred_check
          %p471 = pneg %p118
        $region78: #{tpu_custom_call.1} parent=71 // pred_check_branch
          %473 = sbr.rel (%p471) target = $region80
        $region79: #{tpu_custom_call.1} parent=71 // pred_region
          %475 = dma.done [#allocation7], 384
        $region80: #{tpu_custom_call.1} parent=71 // pred_fallthru
          _
        // Predicated region
        $region81: #{tpu_custom_call.1} parent=71 // pred_check
          %p476 = pneg %p160
        $region82: #{tpu_custom_call.1} parent=71 // pred_check_branch
          %478 = sbr.rel (%p476) target = $region84
        $region83: #{tpu_custom_call.1} parent=71 // pred_region
          %480 = dma.done [#allocation7], 384
        $region84: #{tpu_custom_call.1} parent=71 // pred_fallthru
          _
        // Predicated region
        $region85: #{tpu_custom_call.1} parent=71 // pred_check
          %p481 = pneg %p202
        $region86: #{tpu_custom_call.1} parent=71 // pred_check_branch
          %483 = sbr.rel (%p481) target = $region88
        $region87: #{tpu_custom_call.1} parent=71 // pred_region
          %485 = dma.done [#allocation10], 192
        $region88: #{tpu_custom_call.1} parent=71 // pred_fallthru
          _
        // Predicated region
        $region89: #{tpu_custom_call.1} parent=71 // pred_check
          %p486 = pneg %p244
        $region90: #{tpu_custom_call.1} parent=71 // pred_check_branch
          %488 = sbr.rel (%p486) target = $region92
        $region91: #{tpu_custom_call.1} parent=71 // pred_region
          %490 = dma.done [#allocation10], 128
        $region92: #{tpu_custom_call.1} parent=71 // pred_fallthru
          _
        %s491 = sand.u32 %s42, 1
        %s492 = scalar_lea.sflag [#allocation4], %s491
        %s493 = sand.u32 %s42, 1
        %s494 = smul.addr %s493, 672
        %s495 = scalar_lea.vmem [#allocation3], %s494
        %p496 = pneg %p55
        %p497 = pneg %p52
        %p498 = pneg %p76
        %p499 = pneg %p73
        %p500 = pneg %p97
        %p501 = pneg %p94
        %p502 = pneg %p118
        %p503 = pneg %p115
        %p504 = pneg %p139
        %p505 = pneg %p136
        %p506 = pneg %p160
        %p507 = pneg %p157
        %p508 = pneg %p181
        %p509 = pneg %p178
        %p510 = pneg %p202
        %p511 = pneg %p199
        %p512 = pneg %p223
        %p513 = pneg %p220
        %p514 = pneg %p244
        %p515 = pneg %p241
        %p516 = pneg %p265
        %p517 = pneg %p262
        %p518 = pneg %p286
        %p519 = pneg %p283
        %p520 = pneg %p307
        %p521 = pneg %p304
        %p522 = pneg %p333
        %p523 = pneg %p330
        %s524 = sand.u32 %s320, 1
        %s525 = scalar_lea.sflag [#allocation5], %s524
        %s526 = sand.u32 %s320, 1
        %s527 = smul.addr %s526, 4
        %s528 = scalar_lea.vmem [#allocation12], %s527
        %s529 = smul.u32 4, %s34
        %s530 = smul.u32 4, %s34
        %v532 = vld [vmem:[%s465] sm:$0xff]
        %v533 = vld [vmem:[%s465 + $0x8] sm:$0xff]
        %v534 = vld [vmem:[%s465 + $0x10] sm:$0xff]
        %v535 = vld [vmem:[%s465 + $0x18] sm:$0xff]
        %v536 = vld [vmem:[%s465 + $0x20] sm:$0xff]
        %v537 = vld [vmem:[%s465 + $0x28] sm:$0xff]
        %v538 = vld [vmem:[%s465 + $0x30] sm:$0xff]
        %v539 = vld [vmem:[%s465 + $0x38] sm:$0xff]
        %v540 = vld [vmem:[%s465 + $0x40] sm:$0xff]
        %v541 = vld [vmem:[%s465 + $0x48] sm:$0xff]
        %v542 = vld [vmem:[%s465 + $0x50] sm:$0xff]
        %v543 = vld [vmem:[%s465 + $0x58] sm:$0xff]
        %v544 = vld [vmem:[%s465 + $0x60] sm:$0xff]
        %v545 = vld [vmem:[%s465 + $0x68] sm:$0xff]
        %v546 = vld [vmem:[%s465 + $0x70] sm:$0xff]
        %v547 = vld [vmem:[%s465 + $0x78] sm:$0xff]
        %v548 = vld [vmem:[%s465 + $0x80] sm:$0xff]
        %v549 = vld [vmem:[%s465 + $0x88] sm:$0xff]
        %v550 = vld [vmem:[%s465 + $0x90] sm:$0xff]
        %v551 = vld [vmem:[%s465 + $0x98] sm:$0xff]
        %v552 = vld [vmem:[%s465 + $0xa0] sm:$0xff]
        %v553 = vld [vmem:[%s465 + $0xa8] sm:$0xff]
        %v554 = vld [vmem:[%s465 + $0xb0] sm:$0xff]
        %v555 = vld [vmem:[%s465 + $0xb8] sm:$0xff]
        %v556 = vld [vmem:[%s465 + $0xc0] sm:$0xff]
        %v557 = vld [vmem:[%s465 + $0xc8] sm:$0xff]
        %v558 = vld [vmem:[%s465 + $0xd0] sm:$0xff]
        %v559 = vld [vmem:[%s465 + $0xd8] sm:$0xff]
        %v560 = vld [vmem:[%s465 + $0xe0] sm:$0xff]
        %v561 = vld [vmem:[%s465 + $0xe8] sm:$0xff]
        %v562 = vld [vmem:[%s465 + $0xf0] sm:$0xff]
        %v563 = vld [vmem:[%s465 + $0xf8] sm:$0xff]
        %v564 = vld [vmem:[%s465 + $0x100] sm:$0xff]
        %v565 = vld [vmem:[%s465 + $0x108] sm:$0xff]
        %v566 = vld [vmem:[%s465 + $0x110] sm:$0xff]
        %v567 = vld [vmem:[%s465 + $0x118] sm:$0xff]
        %v568 = vld [vmem:[%s465 + $0x120] sm:$0xff]
        %v569 = vld [vmem:[%s465 + $0x128] sm:$0xff]
        %v570 = vld [vmem:[%s465 + $0x130] sm:$0xff]
        %v571 = vld [vmem:[%s465 + $0x138] sm:$0xff]
        %v572 = vld [vmem:[%s465 + $0x140] sm:$0xff]
        %v573 = vld [vmem:[%s465 + $0x148] sm:$0xff]
        %v574 = vld [vmem:[%s465 + $0x150] sm:$0xff]
        %v575 = vld [vmem:[%s465 + $0x158] sm:$0xff]
        %v576 = vld [vmem:[%s465 + $0x160] sm:$0xff]
        %v577 = vld [vmem:[%s465 + $0x168] sm:$0xff]
        %v578 = vld [vmem:[%s465 + $0x170] sm:$0xff]
        %v579 = vld [vmem:[%s465 + $0x178] sm:$0xff]
        %v580 = vld [vmem:[%s465 + $0x180] sm:$0xff]
        %v581 = vld [vmem:[%s465 + $0x188] sm:$0xff]
        %v582 = vld [vmem:[%s465 + $0x190] sm:$0xff]
        %v583 = vld [vmem:[%s465 + $0x198] sm:$0xff]
        %v584 = vld [vmem:[%s465 + $0x1a0] sm:$0xff]
        %v585 = vld [vmem:[%s465 + $0x1a8] sm:$0xff]
        %v586 = vld [vmem:[%s465 + $0x1b0] sm:$0xff]
        %v587 = vld [vmem:[%s465 + $0x1b8] sm:$0xff]
        %v588 = vld [vmem:[%s465 + $0x1c0] sm:$0xff]
        %v589 = vld [vmem:[%s465 + $0x1c8] sm:$0xff]
        %v590 = vld [vmem:[%s465 + $0x1d0] sm:$0xff]
        %v591 = vld [vmem:[%s465 + $0x1d8] sm:$0xff]
        %v592 = vld [vmem:[%s465 + $0x1e0] sm:$0xff]
        %v593 = vld [vmem:[%s465 + $0x1e8] sm:$0xff]
        %v594 = vld [vmem:[%s465 + $0x1f0] sm:$0xff]
        %v595 = vld [vmem:[%s465 + $0x1f8] sm:$0xff]
        %v596 = vld [vmem:[%s465 + $0x200] sm:$0xff]
        %v597 = vld [vmem:[%s465 + $0x208] sm:$0xff]
        %v598 = vld [vmem:[%s465 + $0x210] sm:$0xff]
        %v599 = vld [vmem:[%s465 + $0x218] sm:$0xff]
        %v600 = vld [vmem:[%s465 + $0x220] sm:$0xff]
        %v601 = vld [vmem:[%s465 + $0x228] sm:$0xff]
        %v602 = vld [vmem:[%s465 + $0x230] sm:$0xff]
        %v603 = vld [vmem:[%s465 + $0x238] sm:$0xff]
        %v604 = vld [vmem:[%s465 + $0x240] sm:$0xff]
        %v605 = vld [vmem:[%s465 + $0x248] sm:$0xff]
        %v606 = vld [vmem:[%s465 + $0x250] sm:$0xff]
        %v607 = vld [vmem:[%s465 + $0x258] sm:$0xff]
        %v608 = vld [vmem:[%s465 + $0x260] sm:$0xff]
        %v609 = vld [vmem:[%s465 + $0x268] sm:$0xff]
        %v610 = vld [vmem:[%s465 + $0x270] sm:$0xff]
        %v611 = vld [vmem:[%s465 + $0x278] sm:$0xff]
        %v612 = vld [vmem:[%s465 + $0x280] sm:$0xff]
        %v613 = vld [vmem:[%s465 + $0x288] sm:$0xff]
        %v614 = vld [vmem:[%s465 + $0x290] sm:$0xff]
        %v615 = vld [vmem:[%s465 + $0x298] sm:$0xff]
        %v616 = vld [vmem:[%s1] sm:$0xff]
        %v617 = vld [vmem:[%s1 + $0x8] sm:$0xff]
        %v618 = vld [vmem:[%s1 + $0x10] sm:$0xff]
        %v619 = vld [vmem:[%s1 + $0x18] sm:$0xff]
        %v620 = vld [vmem:[%s1 + $0x20] sm:$0xff]
        %v621 = vld [vmem:[%s1 + $0x28] sm:$0xff]
        %v622 = vld [vmem:[%s1 + $0x30] sm:$0xff]
        %v623 = vld [vmem:[%s1 + $0x38] sm:$0xff]
        %v624 = vld [vmem:[%s1 + $0x40] sm:$0xff]
        %v625 = vld [vmem:[%s1 + $0x48] sm:$0xff]
        %v626 = vld [vmem:[%s1 + $0x50] sm:$0x33]
        %v627 = vpack.c.bf16 %v536, %v532
        %v628 = vpack.c.bf16 %v537, %v533
        %v629 = vpack.c.bf16 %v538, %v534
        %v630 = vpack.c.bf16 %v539, %v535
        %v631 = vpack.c.bf16 %v544, %v540
        %v632 = vpack.c.bf16 %v545, %v541
        %v633 = vpack.c.bf16 %v546, %v542
        %v634 = vpack.c.bf16 %v547, %v543
        %v635 = vpack.c.bf16 %v552, %v548
        %v636 = vpack.c.bf16 %v553, %v549
        %v637 = vpack.c.bf16 %v554, %v550
        %v638 = vpack.c.bf16 %v555, %v551
        %v639 = vpack.c.bf16 %v560, %v556
        %v640 = vpack.c.bf16 %v561, %v557
        %v641 = vpack.c.bf16 %v562, %v558
        %v642 = vpack.c.bf16 %v563, %v559
        %v643 = vpack.c.bf16 %v568, %v564
        %v644 = vpack.c.bf16 %v569, %v565
        %v645 = vpack.c.bf16 %v570, %v566
        %v646 = vpack.c.bf16 %v571, %v567
        %v647 = vpack.c.bf16 %v576, %v572
        %v648 = vpack.c.bf16 %v577, %v573
        %v649 = vpack.c.bf16 %v578, %v574
        %v650 = vpack.c.bf16 %v579, %v575
        %v651 = vpack.c.bf16 %v584, %v580
        %v652 = vpack.c.bf16 %v585, %v581
        %v653 = vpack.c.bf16 %v586, %v582
        %v654 = vpack.c.bf16 %v587, %v583
        %v655 = vpack.c.bf16 %v592, %v588
        %v656 = vpack.c.bf16 %v593, %v589
        %v657 = vpack.c.bf16 %v594, %v590
        %v658 = vpack.c.bf16 %v595, %v591
        %v659 = vpack.c.bf16 %v600, %v596
        %v660 = vpack.c.bf16 %v601, %v597
        %v661 = vpack.c.bf16 %v602, %v598
        %v662 = vpack.c.bf16 %v603, %v599
        %v663 = vpack.c.bf16 %v608, %v604
        %v664 = vpack.c.bf16 %v609, %v605
        %v665 = vpack.c.bf16 %v610, %v606
        %v666 = vpack.c.bf16 %v611, %v607
        %v667 = vpack.c.bf16 %v612, %v612
        %v668 = vpack.c.bf16 %v613, %v613
        %v669 = vpack.c.bf16 %v614, %v614
        %v670 = vpack.c.bf16 %v615, %v615
        %v671 = vld [vmem:[%s2] sm:$0xff]
        %v672 = vld [vmem:[%s2 + $0x8] sm:$0xff]
        %v673 = vld [vmem:[%s2 + $0x10] sm:$0xff]
        %v674 = vld [vmem:[%s2 + $0x18] sm:$0xff]
        %v675 = vld [vmem:[%s2 + $0x20] sm:$0xff]
        %v676 = vld [vmem:[%s2 + $0x28] sm:$0xff]
        %v677 = vld [vmem:[%s2 + $0x30] sm:$0xff]
        %v678 = vld [vmem:[%s2 + $0x38] sm:$0xff]
        %v679 = vld [vmem:[%s2 + $0x40] sm:$0xff]
        %v680 = vld [vmem:[%s2 + $0x48] sm:$0xff]
        %v681 = vld [vmem:[%s2 + $0x50] sm:$0xf]
        %683 = vset.pattern.permute.xlu0 0
        %684 = vperm.xlu0 %683, %v671
        %v685 = vpop.permute.xlu0 %684
        %688 = vset.pattern.permute.xlu0 0
        %689 = vperm.xlu0 %688, %v672
        %v690 = vpop.permute.xlu0 %689
        %693 = vset.pattern.permute.xlu0 0
        %694 = vperm.xlu0 %693, %v673
        %v695 = vpop.permute.xlu0 %694
        %698 = vset.pattern.permute.xlu0 0
        %699 = vperm.xlu0 %698, %v674
        %v700 = vpop.permute.xlu0 %699
        %703 = vset.pattern.permute.xlu0 0
        %704 = vperm.xlu0 %703, %v675
        %v705 = vpop.permute.xlu0 %704
        %708 = vset.pattern.permute.xlu0 0
        %709 = vperm.xlu0 %708, %v676
        %v710 = vpop.permute.xlu0 %709
        %713 = vset.pattern.permute.xlu0 0
        %714 = vperm.xlu0 %713, %v677
        %v715 = vpop.permute.xlu0 %714
        %718 = vset.pattern.permute.xlu0 0
        %719 = vperm.xlu0 %718, %v678
        %v720 = vpop.permute.xlu0 %719
        %723 = vset.pattern.permute.xlu0 0
        %724 = vperm.xlu0 %723, %v679
        %v725 = vpop.permute.xlu0 %724
        %728 = vset.pattern.permute.xlu0 0
        %729 = vperm.xlu0 %728, %v680
        %v730 = vpop.permute.xlu0 %729
        %733 = vset.pattern.permute.xlu0 0
        %734 = vperm.xlu0 %733, %v681
        %v735 = vpop.permute.xlu0 %734
        %v748 = vunpack.c.l.b16 %v616
        %v749 = vunpack.c.h.b16 %v616
        %v750 = vunpack.c.l.b16 %v617
        %v751 = vunpack.c.h.b16 %v617
        %v752 = vunpack.c.l.b16 %v618
        %v753 = vunpack.c.h.b16 %v618
        %v754 = vunpack.c.l.b16 %v619
        %v755 = vunpack.c.h.b16 %v619
        %v756 = vunpack.c.l.b16 %v620
        %v757 = vunpack.c.h.b16 %v620
        %v758 = vunpack.c.l.b16 %v621
        %v759 = vunpack.c.h.b16 %v621
        %v760 = vunpack.c.l.b16 %v622
        %v761 = vunpack.c.h.b16 %v622
        %v762 = vunpack.c.l.b16 %v623
        %v763 = vunpack.c.h.b16 %v623
        %v764 = vunpack.c.l.b16 %v624
        %v765 = vunpack.c.h.b16 %v624
        %v766 = vunpack.c.l.b16 %v625
        %v767 = vunpack.c.h.b16 %v625
        %v768 = vunpack.c.l.b16 %v626
        %v769 = vunpack.c.h.b16 %v626
        %v770 = vpack.c.b16 %v750, %v748
        %v771 = vpack.c.b16 %v751, %v749
        %v772 = vpack.c.b16 %v754, %v752
        %v773 = vpack.c.b16 %v755, %v753
        %v774 = vpack.c.b16 %v758, %v756
        %v775 = vpack.c.b16 %v759, %v757
        %v776 = vpack.c.b16 %v762, %v760
        %v777 = vpack.c.b16 %v763, %v761
        %v778 = vpack.c.b16 %v766, %v764
        %v779 = vpack.c.b16 %v767, %v765
        %v780 = vpack.c.b16 %v768, %v768
        %v781 = vpack.c.b16 %v769, %v769
        %vm788 = vcmask 326656
        %v790 = vsel %vm788, %v771, 0
        %v793 = vsel %vm788, %v773, 0
        %v796 = vsel %vm788, %v775, 0
        %v799 = vsel %vm788, %v777, 0
        %v802 = vsel %vm788, %v779, 0
        %v805 = vsel %vm788, %v781, 0
        %vm807 = vcmask 1043456
        %v809 = vsel %vm807, %v667, 0
        %v812 = vsel %vm807, %v668, 0
        %v815 = vsel %vm807, %v669, 0
        %v818 = vsel %vm807, %v670, 0
        %820 = vmatpush.bf16.msra.mxu0 %v655
        %821 = vmatpush.bf16.msra.mxu0 %v651
        %822 = vmatpush.bf16.msra.mxu0 %v647
        %823 = vmatpush.bf16.msra.mxu0 %v643
        %824 = vmatpush.bf16.msra.mxu0 %v639
        %825 = vmatpush.bf16.msra.mxu0 %v635
        %826 = vmatpush.bf16.msra.mxu0 %v631
        %827 = vmatpush.bf16.msra.mxu0 %v627
        %828 = vmatmul.bf16.gmra.mxu0 %v770
        %v829 = vpop.f32.mrf.mxu0
        %v830 = vadd.f32 %v685, %v829
        %v831 = vpop.f32.mrf.mxu0
        %v832 = vadd.f32 %v690, %v831
        %833 = vmatmul.bf16.gmra.mxu0 %v772
        %v834 = vpop.f32.mrf.mxu0
        %v835 = vadd.f32 %v695, %v834
        %v836 = vpop.f32.mrf.mxu0
        %v837 = vadd.f32 %v700, %v836
        %838 = vmatmul.bf16.gmra.mxu0 %v774
        %v839 = vpop.f32.mrf.mxu0
        %v840 = vadd.f32 %v705, %v839
        %v841 = vpop.f32.mrf.mxu0
        %v842 = vadd.f32 %v710, %v841
        %843 = vmatmul.bf16.gmra.mxu0 %v776
        %v844 = vpop.f32.mrf.mxu0
        %v845 = vadd.f32 %v715, %v844
        %v846 = vpop.f32.mrf.mxu0
        %v847 = vadd.f32 %v720, %v846
        %848 = vmatmul.bf16.gmra.mxu0 %v778
        %v849 = vpop.f32.mrf.mxu0
        %v850 = vadd.f32 %v725, %v849
        %v851 = vpop.f32.mrf.mxu0
        %v852 = vadd.f32 %v730, %v851
        %853 = vmatmul.bf16.gmra.mxu0 %v780
        %v854 = vpop.f32.mrf.mxu0
        %v855 = vadd.f32 %v735, %v854
        %v856 = vpop.f32.mrf.mxu0
        %857 = vdwg.mxu0
        %858 = vmatpush.bf16.msra.mxu0 0
        %859 = vmatpush.bf16.msra.mxu0 0
        %860 = vmatpush.bf16.msra.mxu0 0
        %861 = vmatpush.bf16.msra.mxu0 0
        %862 = vmatpush.bf16.msra.mxu0 0
        %863 = vmatpush.bf16.msra.mxu0 %v809
        %864 = vmatpush.bf16.msra.mxu0 %v663
        %865 = vmatpush.bf16.msra.mxu0 %v659
        %866 = vmatmul.bf16.gmra.mxu0 %v790
        %v867 = vpop.f32.mrf.mxu0
        %v868 = vadd.f32 %v830, %v867
        %v869 = vpop.f32.mrf.mxu0
        %v870 = vadd.f32 %v832, %v869
        %871 = vmatmul.bf16.gmra.mxu0 %v793
        %v872 = vpop.f32.mrf.mxu0
        %v873 = vadd.f32 %v835, %v872
        %v874 = vpop.f32.mrf.mxu0
        %v875 = vadd.f32 %v837, %v874
        %876 = vmatmul.bf16.gmra.mxu0 %v796
        %v877 = vpop.f32.mrf.mxu0
        %v878 = vadd.f32 %v840, %v877
        %v879 = vpop.f32.mrf.mxu0
        %v880 = vadd.f32 %v842, %v879
        %881 = vmatmul.bf16.gmra.mxu0 %v799
        %v882 = vpop.f32.mrf.mxu0
        %v883 = vadd.f32 %v845, %v882
        %v884 = vpop.f32.mrf.mxu0
        %v885 = vadd.f32 %v847, %v884
        %886 = vmatmul.bf16.gmra.mxu0 %v802
        %v887 = vpop.f32.mrf.mxu0
        %v888 = vadd.f32 %v850, %v887
        %v889 = vpop.f32.mrf.mxu0
        %v890 = vadd.f32 %v852, %v889
        %891 = vmatmul.bf16.gmra.mxu0 %v805
        %v892 = vpop.f32.mrf.mxu0
        %v893 = vadd.f32 %v855, %v892
        %v894 = vpop.f32.mrf.mxu0
        %895 = vdwg.mxu0
        %896 = vmatpush.bf16.msra.mxu0 %v656
        %897 = vmatpush.bf16.msra.mxu0 %v652
        %898 = vmatpush.bf16.msra.mxu0 %v648
        %899 = vmatpush.bf16.msra.mxu0 %v644
        %900 = vmatpush.bf16.msra.mxu0 %v640
        %901 = vmatpush.bf16.msra.mxu0 %v636
        %902 = vmatpush.bf16.msra.mxu0 %v632
        %903 = vmatpush.bf16.msra.mxu0 %v628
        %904 = vmatmul.bf16.gmra.mxu0 %v770
        %v905 = vpop.f32.mrf.mxu0
        %v906 = vadd.f32 %v685, %v905
        %v907 = vpop.f32.mrf.mxu0
        %v908 = vadd.f32 %v690, %v907
        %909 = vmatmul.bf16.gmra.mxu0 %v772
        %v910 = vpop.f32.mrf.mxu0
        %v911 = vadd.f32 %v695, %v910
        %v912 = vpop.f32.mrf.mxu0
        %v913 = vadd.f32 %v700, %v912
        %914 = vmatmul.bf16.gmra.mxu0 %v774
        %v915 = vpop.f32.mrf.mxu0
        %v916 = vadd.f32 %v705, %v915
        %v917 = vpop.f32.mrf.mxu0
        %v918 = vadd.f32 %v710, %v917
        %919 = vmatmul.bf16.gmra.mxu0 %v776
        %v920 = vpop.f32.mrf.mxu0
        %v921 = vadd.f32 %v715, %v920
        %v922 = vpop.f32.mrf.mxu0
        %v923 = vadd.f32 %v720, %v922
        %924 = vmatmul.bf16.gmra.mxu0 %v778
        %v925 = vpop.f32.mrf.mxu0
        %v926 = vadd.f32 %v725, %v925
        %v927 = vpop.f32.mrf.mxu0
        %v928 = vadd.f32 %v730, %v927
        %929 = vmatmul.bf16.gmra.mxu0 %v780
        %v930 = vpop.f32.mrf.mxu0
        %v931 = vadd.f32 %v735, %v930
        %v932 = vpop.f32.mrf.mxu0
        %933 = vdwg.mxu0
        %934 = vmatpush.bf16.msra.mxu0 0
        %935 = vmatpush.bf16.msra.mxu0 0
        %936 = vmatpush.bf16.msra.mxu0 0
        %937 = vmatpush.bf16.msra.mxu0 0
        %938 = vmatpush.bf16.msra.mxu0 0
        %939 = vmatpush.bf16.msra.mxu0 %v812
        %940 = vmatpush.bf16.msra.mxu0 %v664
        %941 = vmatpush.bf16.msra.mxu0 %v660
        %942 = vmatmul.bf16.gmra.mxu0 %v790
        %v943 = vpop.f32.mrf.mxu0
        %v944 = vadd.f32 %v906, %v943
        %v945 = vpop.f32.mrf.mxu0
        %v946 = vadd.f32 %v908, %v945
        %947 = vmatmul.bf16.gmra.mxu0 %v793
        %v948 = vpop.f32.mrf.mxu0
        %v949 = vadd.f32 %v911, %v948
        %v950 = vpop.f32.mrf.mxu0
        %v951 = vadd.f32 %v913, %v950
        %952 = vmatmul.bf16.gmra.mxu0 %v796
        %v953 = vpop.f32.mrf.mxu0
        %v954 = vadd.f32 %v916, %v953
        %v955 = vpop.f32.mrf.mxu0
        %v956 = vadd.f32 %v918, %v955
        %957 = vmatmul.bf16.gmra.mxu0 %v799
        %v958 = vpop.f32.mrf.mxu0
        %v959 = vadd.f32 %v921, %v958
        %v960 = vpop.f32.mrf.mxu0
        %v961 = vadd.f32 %v923, %v960
        %962 = vmatmul.bf16.gmra.mxu0 %v802
        %v963 = vpop.f32.mrf.mxu0
        %v964 = vadd.f32 %v926, %v963
        %v965 = vpop.f32.mrf.mxu0
        %v966 = vadd.f32 %v928, %v965
        %967 = vmatmul.bf16.gmra.mxu0 %v805
        %v968 = vpop.f32.mrf.mxu0
        %v969 = vadd.f32 %v931, %v968
        %v970 = vpop.f32.mrf.mxu0
        %971 = vdwg.mxu0
        %972 = vmatpush.bf16.msra.mxu0 %v657
        %973 = vmatpush.bf16.msra.mxu0 %v653
        %974 = vmatpush.bf16.msra.mxu0 %v649
        %975 = vmatpush.bf16.msra.mxu0 %v645
        %976 = vmatpush.bf16.msra.mxu0 %v641
        %977 = vmatpush.bf16.msra.mxu0 %v637
        %978 = vmatpush.bf16.msra.mxu0 %v633
        %979 = vmatpush.bf16.msra.mxu0 %v629
        %980 = vmatmul.bf16.gmra.mxu0 %v770
        %v981 = vpop.f32.mrf.mxu0
        %v982 = vadd.f32 %v685, %v981
        %v983 = vpop.f32.mrf.mxu0
        %v984 = vadd.f32 %v690, %v983
        %985 = vmatmul.bf16.gmra.mxu0 %v772
        %v986 = vpop.f32.mrf.mxu0
        %v987 = vadd.f32 %v695, %v986
        %v988 = vpop.f32.mrf.mxu0
        %v989 = vadd.f32 %v700, %v988
        %990 = vmatmul.bf16.gmra.mxu0 %v774
        %v991 = vpop.f32.mrf.mxu0
        %v992 = vadd.f32 %v705, %v991
        %v993 = vpop.f32.mrf.mxu0
        %v994 = vadd.f32 %v710, %v993
        %995 = vmatmul.bf16.gmra.mxu0 %v776
        %v996 = vpop.f32.mrf.mxu0
        %v997 = vadd.f32 %v715, %v996
        %v998 = vpop.f32.mrf.mxu0
        %v999 = vadd.f32 %v720, %v998
        %1000 = vmatmul.bf16.gmra.mxu0 %v778
        %v1001 = vpop.f32.mrf.mxu0
        %v1002 = vadd.f32 %v725, %v1001
        %v1003 = vpop.f32.mrf.mxu0
        %v1004 = vadd.f32 %v730, %v1003
        %1005 = vmatmul.bf16.gmra.mxu0 %v780
        %v1006 = vpop.f32.mrf.mxu0
        %v1007 = vadd.f32 %v735, %v1006
        %v1008 = vpop.f32.mrf.mxu0
        %1009 = vdwg.mxu0
        %1010 = vmatpush.bf16.msra.mxu0 0
        %1011 = vmatpush.bf16.msra.mxu0 0
        %1012 = vmatpush.bf16.msra.mxu0 0
        %1013 = vmatpush.bf16.msra.mxu0 0
        %1014 = vmatpush.bf16.msra.mxu0 0
        %1015 = vmatpush.bf16.msra.mxu0 %v815
        %1016 = vmatpush.bf16.msra.mxu0 %v665
        %1017 = vmatpush.bf16.msra.mxu0 %v661
        %1018 = vmatmul.bf16.gmra.mxu0 %v790
        %v1019 = vpop.f32.mrf.mxu0
        %v1020 = vadd.f32 %v982, %v1019
        %v1021 = vpop.f32.mrf.mxu0
        %v1022 = vadd.f32 %v984, %v1021
        %1023 = vmatmul.bf16.gmra.mxu0 %v793
        %v1024 = vpop.f32.mrf.mxu0
        %v1025 = vadd.f32 %v987, %v1024
        %v1026 = vpop.f32.mrf.mxu0
        %v1027 = vadd.f32 %v989, %v1026
        %1028 = vmatmul.bf16.gmra.mxu0 %v796
        %v1029 = vpop.f32.mrf.mxu0
        %v1030 = vadd.f32 %v992, %v1029
        %v1031 = vpop.f32.mrf.mxu0
        %v1032 = vadd.f32 %v994, %v1031
        %1033 = vmatmul.bf16.gmra.mxu0 %v799
        %v1034 = vpop.f32.mrf.mxu0
        %v1035 = vadd.f32 %v997, %v1034
        %v1036 = vpop.f32.mrf.mxu0
        %v1037 = vadd.f32 %v999, %v1036
        %1038 = vmatmul.bf16.gmra.mxu0 %v802
        %v1039 = vpop.f32.mrf.mxu0
        %v1040 = vadd.f32 %v1002, %v1039
        %v1041 = vpop.f32.mrf.mxu0
        %v1042 = vadd.f32 %v1004, %v1041
        %1043 = vmatmul.bf16.gmra.mxu0 %v805
        %v1044 = vpop.f32.mrf.mxu0
        %v1045 = vadd.f32 %v1007, %v1044
        %v1046 = vpop.f32.mrf.mxu0
        %1047 = vdwg.mxu0
        %1048 = vmatpush.bf16.msra.mxu0 %v658
        %1049 = vmatpush.bf16.msra.mxu0 %v654
        %1050 = vmatpush.bf16.msra.mxu0 %v650
        %1051 = vmatpush.bf16.msra.mxu0 %v646
        %1052 = vmatpush.bf16.msra.mxu0 %v642
        %1053 = vmatpush.bf16.msra.mxu0 %v638
        %1054 = vmatpush.bf16.msra.mxu0 %v634
        %1055 = vmatpush.bf16.msra.mxu0 %v630
        %1056 = vmatmul.bf16.gmra.mxu0 %v770
        %v1057 = vpop.f32.mrf.mxu0
        %v1058 = vadd.f32 %v685, %v1057
        %v1059 = vpop.f32.mrf.mxu0
        %v1060 = vadd.f32 %v690, %v1059
        %1061 = vmatmul.bf16.gmra.mxu0 %v772
        %v1062 = vpop.f32.mrf.mxu0
        %v1063 = vadd.f32 %v695, %v1062
        %v1064 = vpop.f32.mrf.mxu0
        %v1065 = vadd.f32 %v700, %v1064
        %1066 = vmatmul.bf16.gmra.mxu0 %v774
        %v1067 = vpop.f32.mrf.mxu0
        %v1068 = vadd.f32 %v705, %v1067
        %v1069 = vpop.f32.mrf.mxu0
        %v1070 = vadd.f32 %v710, %v1069
        %1071 = vmatmul.bf16.gmra.mxu0 %v776
        %v1072 = vpop.f32.mrf.mxu0
        %v1073 = vadd.f32 %v715, %v1072
        %v1074 = vpop.f32.mrf.mxu0
        %v1075 = vadd.f32 %v720, %v1074
        %1076 = vmatmul.bf16.gmra.mxu0 %v778
        %v1077 = vpop.f32.mrf.mxu0
        %v1078 = vadd.f32 %v725, %v1077
        %v1079 = vpop.f32.mrf.mxu0
        %v1080 = vadd.f32 %v730, %v1079
        %1081 = vmatmul.bf16.gmra.mxu0 %v780
        %v1082 = vpop.f32.mrf.mxu0
        %v1083 = vadd.f32 %v735, %v1082
        %v1084 = vpop.f32.mrf.mxu0
        %1085 = vdwg.mxu0
        %1086 = vmatpush.bf16.msra.mxu0 0
        %1087 = vmatpush.bf16.msra.mxu0 0
        %1088 = vmatpush.bf16.msra.mxu0 0
        %1089 = vmatpush.bf16.msra.mxu0 0
        %1090 = vmatpush.bf16.msra.mxu0 0
        %1091 = vmatpush.bf16.msra.mxu0 %v818
        %1092 = vmatpush.bf16.msra.mxu0 %v666
        %1093 = vmatpush.bf16.msra.mxu0 %v662
        %1094 = vmatmul.bf16.gmra.mxu0 %v790
        %v1095 = vpop.f32.mrf.mxu0
        %v1096 = vadd.f32 %v1058, %v1095
        %v1097 = vpop.f32.mrf.mxu0
        %v1098 = vadd.f32 %v1060, %v1097
        %1099 = vmatmul.bf16.gmra.mxu0 %v793
        %v1100 = vpop.f32.mrf.mxu0
        %v1101 = vadd.f32 %v1063, %v1100
        %v1102 = vpop.f32.mrf.mxu0
        %v1103 = vadd.f32 %v1065, %v1102
        %1104 = vmatmul.bf16.gmra.mxu0 %v796
        %v1105 = vpop.f32.mrf.mxu0
        %v1106 = vadd.f32 %v1068, %v1105
        %v1107 = vpop.f32.mrf.mxu0
        %v1108 = vadd.f32 %v1070, %v1107
        %1109 = vmatmul.bf16.gmra.mxu0 %v799
        %v1110 = vpop.f32.mrf.mxu0
        %v1111 = vadd.f32 %v1073, %v1110
        %v1112 = vpop.f32.mrf.mxu0
        %v1113 = vadd.f32 %v1075, %v1112
        %1114 = vmatmul.bf16.gmra.mxu0 %v802
        %v1115 = vpop.f32.mrf.mxu0
        %v1116 = vadd.f32 %v1078, %v1115
        %v1117 = vpop.f32.mrf.mxu0
        %v1118 = vadd.f32 %v1080, %v1117
        %1119 = vmatmul.bf16.gmra.mxu0 %v805
        %v1120 = vpop.f32.mrf.mxu0
        %v1121 = vadd.f32 %v1083, %v1120
        %v1122 = vpop.f32.mrf.mxu0
        %1123 = vdwg.mxu0
        %vm1124 = vcmp.ge.f32.partialorder %v868, 0.0
        %vm1125 = vcmp.ge.f32.partialorder %v944, 0.0
        %vm1126 = vcmp.ge.f32.partialorder %v1020, 0.0
        %vm1127 = vcmp.ge.f32.partialorder %v1096, 0.0
        %vm1128 = vcmp.ge.f32.partialorder %v870, 0.0
        %vm1129 = vcmp.ge.f32.partialorder %v946, 0.0
        %vm1130 = vcmp.ge.f32.partialorder %v1022, 0.0
        %vm1131 = vcmp.ge.f32.partialorder %v1098, 0.0
        %vm1132 = vcmp.ge.f32.partialorder %v873, 0.0
        %vm1133 = vcmp.ge.f32.partialorder %v949, 0.0
        %vm1134 = vcmp.ge.f32.partialorder %v1025, 0.0
        %vm1135 = vcmp.ge.f32.partialorder %v1101, 0.0
        %vm1136 = vcmp.ge.f32.partialorder %v875, 0.0
        %vm1137 = vcmp.ge.f32.partialorder %v951, 0.0
        %vm1138 = vcmp.ge.f32.partialorder %v1027, 0.0
        %vm1139 = vcmp.ge.f32.partialorder %v1103, 0.0
        %vm1140 = vcmp.ge.f32.partialorder %v878, 0.0
        %vm1141 = vcmp.ge.f32.partialorder %v954, 0.0
        %vm1142 = vcmp.ge.f32.partialorder %v1030, 0.0
        %vm1143 = vcmp.ge.f32.partialorder %v1106, 0.0
        %vm1144 = vcmp.ge.f32.partialorder %v880, 0.0
        %vm1145 = vcmp.ge.f32.partialorder %v956, 0.0
        %vm1146 = vcmp.ge.f32.partialorder %v1032, 0.0
        %vm1147 = vcmp.ge.f32.partialorder %v1108, 0.0
        %vm1148 = vcmp.ge.f32.partialorder %v883, 0.0
        %vm1149 = vcmp.ge.f32.partialorder %v959, 0.0
        %vm1150 = vcmp.ge.f32.partialorder %v1035, 0.0
        %vm1151 = vcmp.ge.f32.partialorder %v1111, 0.0
        %vm1152 = vcmp.ge.f32.partialorder %v885, 0.0
        %vm1153 = vcmp.ge.f32.partialorder %v961, 0.0
        %vm1154 = vcmp.ge.f32.partialorder %v1037, 0.0
        %vm1155 = vcmp.ge.f32.partialorder %v1113, 0.0
        %vm1156 = vcmp.ge.f32.partialorder %v888, 0.0
        %vm1157 = vcmp.ge.f32.partialorder %v964, 0.0
        %vm1158 = vcmp.ge.f32.partialorder %v1040, 0.0
        %vm1159 = vcmp.ge.f32.partialorder %v1116, 0.0
        %vm1160 = vcmp.ge.f32.partialorder %v890, 0.0
        %vm1161 = vcmp.ge.f32.partialorder %v966, 0.0
        %vm1162 = vcmp.ge.f32.partialorder %v1042, 0.0
        %vm1163 = vcmp.ge.f32.partialorder %v1118, 0.0
        %vm1164 = vcmp.ge.f32.partialorder %v893, 0.0
        %vm1165 = vcmp.ge.f32.partialorder %v969, 0.0
        %vm1166 = vcmp.ge.f32.partialorder %v1045, 0.0
        %vm1167 = vcmp.ge.f32.partialorder %v1121, 0.0
        %v1168 = vmul.f32 %v868, 0.01
        %v1169 = vmul.f32 %v944, 0.01
        %v1170 = vmul.f32 %v1020, 0.01
        %v1171 = vmul.f32 %v1096, 0.01
        %v1172 = vmul.f32 %v870, 0.01
        %v1173 = vmul.f32 %v946, 0.01
        %v1174 = vmul.f32 %v1022, 0.01
        %v1175 = vmul.f32 %v1098, 0.01
        %v1176 = vmul.f32 %v873, 0.01
        %v1177 = vmul.f32 %v949, 0.01
        %v1178 = vmul.f32 %v1025, 0.01
        %v1179 = vmul.f32 %v1101, 0.01
        %v1180 = vmul.f32 %v875, 0.01
        %v1181 = vmul.f32 %v951, 0.01
        %v1182 = vmul.f32 %v1027, 0.01
        %v1183 = vmul.f32 %v1103, 0.01
        %v1184 = vmul.f32 %v878, 0.01
        %v1185 = vmul.f32 %v954, 0.01
        %v1186 = vmul.f32 %v1030, 0.01
        %v1187 = vmul.f32 %v1106, 0.01
        %v1188 = vmul.f32 %v880, 0.01
        %v1189 = vmul.f32 %v956, 0.01
        %v1190 = vmul.f32 %v1032, 0.01
        %v1191 = vmul.f32 %v1108, 0.01
        %v1192 = vmul.f32 %v883, 0.01
        %v1193 = vmul.f32 %v959, 0.01
        %v1194 = vmul.f32 %v1035, 0.01
        %v1195 = vmul.f32 %v1111, 0.01
        %v1196 = vmul.f32 %v885, 0.01
        %v1197 = vmul.f32 %v961, 0.01
        %v1198 = vmul.f32 %v1037, 0.01
        %v1199 = vmul.f32 %v1113, 0.01
        %v1200 = vmul.f32 %v888, 0.01
        %v1201 = vmul.f32 %v964, 0.01
        %v1202 = vmul.f32 %v1040, 0.01
        %v1203 = vmul.f32 %v1116, 0.01
        %v1204 = vmul.f32 %v890, 0.01
        %v1205 = vmul.f32 %v966, 0.01
        %v1206 = vmul.f32 %v1042, 0.01
        %v1207 = vmul.f32 %v1118, 0.01
        %v1208 = vmul.f32 %v893, 0.01
        %v1209 = vmul.f32 %v969, 0.01
        %v1210 = vmul.f32 %v1045, 0.01
        %v1211 = vmul.f32 %v1121, 0.01
        %v1212 = vsel %vm1124, %v868, %v1168
        %v1213 = vsel %vm1125, %v944, %v1169
        %v1214 = vsel %vm1126, %v1020, %v1170
        %v1215 = vsel %vm1127, %v1096, %v1171
        %v1216 = vsel %vm1128, %v870, %v1172
        %v1217 = vsel %vm1129, %v946, %v1173
        %v1218 = vsel %vm1130, %v1022, %v1174
        %v1219 = vsel %vm1131, %v1098, %v1175
        %v1220 = vsel %vm1132, %v873, %v1176
        %v1221 = vsel %vm1133, %v949, %v1177
        %v1222 = vsel %vm1134, %v1025, %v1178
        %v1223 = vsel %vm1135, %v1101, %v1179
        %v1224 = vsel %vm1136, %v875, %v1180
        %v1225 = vsel %vm1137, %v951, %v1181
        %v1226 = vsel %vm1138, %v1027, %v1182
        %v1227 = vsel %vm1139, %v1103, %v1183
        %v1228 = vsel %vm1140, %v878, %v1184
        %v1229 = vsel %vm1141, %v954, %v1185
        %v1230 = vsel %vm1142, %v1030, %v1186
        %v1231 = vsel %vm1143, %v1106, %v1187
        %v1232 = vsel %vm1144, %v880, %v1188
        %v1233 = vsel %vm1145, %v956, %v1189
        %v1234 = vsel %vm1146, %v1032, %v1190
        %v1235 = vsel %vm1147, %v1108, %v1191
        %v1236 = vsel %vm1148, %v883, %v1192
        %v1237 = vsel %vm1149, %v959, %v1193
        %v1238 = vsel %vm1150, %v1035, %v1194
        %v1239 = vsel %vm1151, %v1111, %v1195
        %v1240 = vsel %vm1152, %v885, %v1196
        %v1241 = vsel %vm1153, %v961, %v1197
        %v1242 = vsel %vm1154, %v1037, %v1198
        %v1243 = vsel %vm1155, %v1113, %v1199
        %v1244 = vsel %vm1156, %v888, %v1200
        %v1245 = vsel %vm1157, %v964, %v1201
        %v1246 = vsel %vm1158, %v1040, %v1202
        %v1247 = vsel %vm1159, %v1116, %v1203
        %v1248 = vsel %vm1160, %v890, %v1204
        %v1249 = vsel %vm1161, %v966, %v1205
        %v1250 = vsel %vm1162, %v1042, %v1206
        %v1251 = vsel %vm1163, %v1118, %v1207
        %v1252 = vsel %vm1164, %v893, %v1208
        %v1253 = vsel %vm1165, %v969, %v1209
        %v1254 = vsel %vm1166, %v1045, %v1210
        %v1255 = vsel %vm1167, %v1121, %v1211
        %v1256 = vld [vmem:[#allocation6] sm:$0xf]
        %v1257 = vld [vmem:[#allocation6 + $0x4] sm:$0xf]
        %v1258 = vld [vmem:[#allocation6 + $0x8] sm:$0xf]
        %v1259 = vld [vmem:[#allocation6 + $0xc] sm:$0xf]
        %v1260 = vld [vmem:[#allocation6 + $0x10] sm:$0xf]
        %v1261 = vld [vmem:[#allocation6 + $0x14] sm:$0x1]
        %v1262 = vpack.c.bf16 %v1216, %v1212
        %v1263 = vpack.c.bf16 %v1217, %v1213
        %v1264 = vpack.c.bf16 %v1218, %v1214
        %v1265 = vpack.c.bf16 %v1219, %v1215
        %v1266 = vpack.c.bf16 %v1224, %v1220
        %v1267 = vpack.c.bf16 %v1225, %v1221
        %v1268 = vpack.c.bf16 %v1226, %v1222
        %v1269 = vpack.c.bf16 %v1227, %v1223
        %v1270 = vpack.c.bf16 %v1232, %v1228
        %v1271 = vpack.c.bf16 %v1233, %v1229
        %v1272 = vpack.c.bf16 %v1234, %v1230
        %v1273 = vpack.c.bf16 %v1235, %v1231
        %v1274 = vpack.c.bf16 %v1240, %v1236
        %v1275 = vpack.c.bf16 %v1241, %v1237
        %v1276 = vpack.c.bf16 %v1242, %v1238
        %v1277 = vpack.c.bf16 %v1243, %v1239
        %v1278 = vpack.c.bf16 %v1248, %v1244
        %v1279 = vpack.c.bf16 %v1249, %v1245
        %v1280 = vpack.c.bf16 %v1250, %v1246
        %v1281 = vpack.c.bf16 %v1251, %v1247
        %v1282 = vpack.c.bf16 %v1252, %v1252
        %v1283 = vpack.c.bf16 %v1253, %v1253
        %v1284 = vpack.c.bf16 %v1254, %v1254
        %v1285 = vpack.c.bf16 %v1255, %v1255
        %v1286 = vld [vmem:[%s4] sm:$0xff]
        %v1287 = vld [vmem:[%s4 + $0x8] sm:$0xff]
        %v1288 = vld [vmem:[%s4 + $0x10] sm:$0xff]
        %v1289 = vld [vmem:[%s4 + $0x18] sm:$0xff]
        %v1290 = vld [vmem:[%s4 + $0x20] sm:$0xff]
        %v1291 = vld [vmem:[%s4 + $0x28] sm:$0x3]
        %1293 = vset.pattern.permute.xlu0 0
        %1294 = vperm.xlu0 %1293, %v1286
        %v1295 = vpop.permute.xlu0 %1294
        %1298 = vset.pattern.permute.xlu0 0
        %1299 = vperm.xlu0 %1298, %v1287
        %v1300 = vpop.permute.xlu0 %1299
        %1303 = vset.pattern.permute.xlu0 0
        %1304 = vperm.xlu0 %1303, %v1288
        %v1305 = vpop.permute.xlu0 %1304
        %1308 = vset.pattern.permute.xlu0 0
        %1309 = vperm.xlu0 %1308, %v1289
        %v1310 = vpop.permute.xlu0 %1309
        %1313 = vset.pattern.permute.xlu0 0
        %1314 = vperm.xlu0 %1313, %v1290
        %v1315 = vpop.permute.xlu0 %1314
        %1318 = vset.pattern.permute.xlu0 0
        %1319 = vperm.xlu0 %1318, %v1291
        %v1320 = vpop.permute.xlu0 %1319
        %v1328 = vunpack.c.l.b16 %v1256
        %v1329 = vunpack.c.l.b16 %v1257
        %v1330 = vunpack.c.l.b16 %v1258
        %v1331 = vunpack.c.l.b16 %v1259
        %v1332 = vunpack.c.l.b16 %v1260
        %v1333 = vunpack.c.l.b16 %v1261
        %v1334 = vpack.c.b16 %v1329, %v1328
        %v1335 = vpack.c.b16 %v1331, %v1330
        %v1336 = vpack.c.b16 %v1333, %v1332
        %vm1337 = vcmask 687104
        %v1339 = vsel %vm1337, %v1334, 0
        %v1342 = vsel %vm1337, %v1335, 0
        %v1345 = vsel %vm1337, %v1336, 0
        %vm1347 = vcmask 1041408
        %v1349 = vsel %vm1347, %v1282, 0
        %v1352 = vsel %vm1347, %v1283, 0
        %v1355 = vsel %vm1347, %v1284, 0
        %v1358 = vsel %vm1347, %v1285, 0
        %1360 = vmatpush.bf16.msra.mxu0 0
        %1361 = vmatpush.bf16.msra.mxu0 0
        %1362 = vmatpush.bf16.msra.mxu0 %v1349
        %1363 = vmatpush.bf16.msra.mxu0 %v1278
        %1364 = vmatpush.bf16.msra.mxu0 %v1274
        %1365 = vmatpush.bf16.msra.mxu0 %v1270
        %1366 = vmatpush.bf16.msra.mxu0 %v1266
        %1367 = vmatpush.bf16.msra.mxu0 %v1262
        %1368 = vmatmul.bf16.gmra.mxu0 %v1339
        %v1369 = vpop.f32.mrf.mxu0
        %v1370 = vadd.f32 %v1295, %v1369
        %v1371 = vpop.f32.mrf.mxu0
        %v1372 = vadd.f32 %v1300, %v1371
        %1373 = vmatmul.bf16.gmra.mxu0 %v1342
        %v1374 = vpop.f32.mrf.mxu0
        %v1375 = vadd.f32 %v1305, %v1374
        %v1376 = vpop.f32.mrf.mxu0
        %v1377 = vadd.f32 %v1310, %v1376
        %1378 = vmatmul.bf16.gmra.mxu0 %v1345
        %v1379 = vpop.f32.mrf.mxu0
        %v1380 = vadd.f32 %v1315, %v1379
        %v1381 = vpop.f32.mrf.mxu0
        %v1382 = vadd.f32 %v1320, %v1381
        %1383 = vdwg.mxu0
        %1384 = vmatpush.bf16.msra.mxu0 0
        %1385 = vmatpush.bf16.msra.mxu0 0
        %1386 = vmatpush.bf16.msra.mxu0 %v1352
        %1387 = vmatpush.bf16.msra.mxu0 %v1279
        %1388 = vmatpush.bf16.msra.mxu0 %v1275
        %1389 = vmatpush.bf16.msra.mxu0 %v1271
        %1390 = vmatpush.bf16.msra.mxu0 %v1267
        %1391 = vmatpush.bf16.msra.mxu0 %v1263
        %1392 = vmatmul.bf16.gmra.mxu0 %v1339
        %v1393 = vpop.f32.mrf.mxu0
        %v1394 = vadd.f32 %v1295, %v1393
        %v1395 = vpop.f32.mrf.mxu0
        %v1396 = vadd.f32 %v1300, %v1395
        %1397 = vmatmul.bf16.gmra.mxu0 %v1342
        %v1398 = vpop.f32.mrf.mxu0
        %v1399 = vadd.f32 %v1305, %v1398
        %v1400 = vpop.f32.mrf.mxu0
        %v1401 = vadd.f32 %v1310, %v1400
        %1402 = vmatmul.bf16.gmra.mxu0 %v1345
        %v1403 = vpop.f32.mrf.mxu0
        %v1404 = vadd.f32 %v1315, %v1403
        %v1405 = vpop.f32.mrf.mxu0
        %v1406 = vadd.f32 %v1320, %v1405
        %1407 = vdwg.mxu0
        %1408 = vmatpush.bf16.msra.mxu0 0
        %1409 = vmatpush.bf16.msra.mxu0 0
        %1410 = vmatpush.bf16.msra.mxu0 %v1355
        %1411 = vmatpush.bf16.msra.mxu0 %v1280
        %1412 = vmatpush.bf16.msra.mxu0 %v1276
        %1413 = vmatpush.bf16.msra.mxu0 %v1272
        %1414 = vmatpush.bf16.msra.mxu0 %v1268
        %1415 = vmatpush.bf16.msra.mxu0 %v1264
        %1416 = vmatmul.bf16.gmra.mxu0 %v1339
        %v1417 = vpop.f32.mrf.mxu0
        %v1418 = vadd.f32 %v1295, %v1417
        %v1419 = vpop.f32.mrf.mxu0
        %v1420 = vadd.f32 %v1300, %v1419
        %1421 = vmatmul.bf16.gmra.mxu0 %v1342
        %v1422 = vpop.f32.mrf.mxu0
        %v1423 = vadd.f32 %v1305, %v1422
        %v1424 = vpop.f32.mrf.mxu0
        %v1425 = vadd.f32 %v1310, %v1424
        %1426 = vmatmul.bf16.gmra.mxu0 %v1345
        %v1427 = vpop.f32.mrf.mxu0
        %v1428 = vadd.f32 %v1315, %v1427
        %v1429 = vpop.f32.mrf.mxu0
        %v1430 = vadd.f32 %v1320, %v1429
        %1431 = vdwg.mxu0
        %1432 = vmatpush.bf16.msra.mxu0 0
        %1433 = vmatpush.bf16.msra.mxu0 0
        %1434 = vmatpush.bf16.msra.mxu0 %v1358
        %1435 = vmatpush.bf16.msra.mxu0 %v1281
        %1436 = vmatpush.bf16.msra.mxu0 %v1277
        %1437 = vmatpush.bf16.msra.mxu0 %v1273
        %1438 = vmatpush.bf16.msra.mxu0 %v1269
        %1439 = vmatpush.bf16.msra.mxu0 %v1265
        %1440 = vmatmul.bf16.gmra.mxu0 %v1339
        %v1441 = vpop.f32.mrf.mxu0
        %v1442 = vadd.f32 %v1295, %v1441
        %v1443 = vpop.f32.mrf.mxu0
        %v1444 = vadd.f32 %v1300, %v1443
        %1445 = vmatmul.bf16.gmra.mxu0 %v1342
        %v1446 = vpop.f32.mrf.mxu0
        %v1447 = vadd.f32 %v1305, %v1446
        %v1448 = vpop.f32.mrf.mxu0
        %v1449 = vadd.f32 %v1310, %v1448
        %1450 = vmatmul.bf16.gmra.mxu0 %v1345
        %v1451 = vpop.f32.mrf.mxu0
        %v1452 = vadd.f32 %v1315, %v1451
        %v1453 = vpop.f32.mrf.mxu0
        %v1454 = vadd.f32 %v1320, %v1453
        %1455 = vdwg.mxu0
        %vm1456 = vcmp.ge.f32.partialorder %v1370, 0.0
        %vm1457 = vcmp.ge.f32.partialorder %v1394, 0.0
        %vm1458 = vcmp.ge.f32.partialorder %v1418, 0.0
        %vm1459 = vcmp.ge.f32.partialorder %v1442, 0.0
        %vm1460 = vcmp.ge.f32.partialorder %v1372, 0.0
        %vm1461 = vcmp.ge.f32.partialorder %v1396, 0.0
        %vm1462 = vcmp.ge.f32.partialorder %v1420, 0.0
        %vm1463 = vcmp.ge.f32.partialorder %v1444, 0.0
        %vm1464 = vcmp.ge.f32.partialorder %v1375, 0.0
        %vm1465 = vcmp.ge.f32.partialorder %v1399, 0.0
        %vm1466 = vcmp.ge.f32.partialorder %v1423, 0.0
        %vm1467 = vcmp.ge.f32.partialorder %v1447, 0.0
        %vm1468 = vcmp.ge.f32.partialorder %v1377, 0.0
        %vm1469 = vcmp.ge.f32.partialorder %v1401, 0.0
        %vm1470 = vcmp.ge.f32.partialorder %v1425, 0.0
        %vm1471 = vcmp.ge.f32.partialorder %v1449, 0.0
        %vm1472 = vcmp.ge.f32.partialorder %v1380, 0.0
        %vm1473 = vcmp.ge.f32.partialorder %v1404, 0.0
        %vm1474 = vcmp.ge.f32.partialorder %v1428, 0.0
        %vm1475 = vcmp.ge.f32.partialorder %v1452, 0.0
        %vm1476 = vcmp.ge.f32.partialorder %v1382, 0.0
        %vm1477 = vcmp.ge.f32.partialorder %v1406, 0.0
        %vm1478 = vcmp.ge.f32.partialorder %v1430, 0.0
        %vm1479 = vcmp.ge.f32.partialorder %v1454, 0.0
        %v1480 = vmul.f32 %v1370, 0.01
        %v1481 = vmul.f32 %v1394, 0.01
        %v1482 = vmul.f32 %v1418, 0.01
        %v1483 = vmul.f32 %v1442, 0.01
        %v1484 = vmul.f32 %v1372, 0.01
        %v1485 = vmul.f32 %v1396, 0.01
        %v1486 = vmul.f32 %v1420, 0.01
        %v1487 = vmul.f32 %v1444, 0.01
        %v1488 = vmul.f32 %v1375, 0.01
        %v1489 = vmul.f32 %v1399, 0.01
        %v1490 = vmul.f32 %v1423, 0.01
        %v1491 = vmul.f32 %v1447, 0.01
        %v1492 = vmul.f32 %v1377, 0.01
        %v1493 = vmul.f32 %v1401, 0.01
        %v1494 = vmul.f32 %v1425, 0.01
        %v1495 = vmul.f32 %v1449, 0.01
        %v1496 = vmul.f32 %v1380, 0.01
        %v1497 = vmul.f32 %v1404, 0.01
        %v1498 = vmul.f32 %v1428, 0.01
        %v1499 = vmul.f32 %v1452, 0.01
        %v1500 = vmul.f32 %v1382, 0.01
        %v1501 = vmul.f32 %v1406, 0.01
        %v1502 = vmul.f32 %v1430, 0.01
        %v1503 = vmul.f32 %v1454, 0.01
        %v1504 = vsel %vm1456, %v1370, %v1480
        %v1505 = vsel %vm1457, %v1394, %v1481
        %v1506 = vsel %vm1458, %v1418, %v1482
        %v1507 = vsel %vm1459, %v1442, %v1483
        %v1508 = vsel %vm1460, %v1372, %v1484
        %v1509 = vsel %vm1461, %v1396, %v1485
        %v1510 = vsel %vm1462, %v1420, %v1486
        %v1511 = vsel %vm1463, %v1444, %v1487
        %v1512 = vsel %vm1464, %v1375, %v1488
        %v1513 = vsel %vm1465, %v1399, %v1489
        %v1514 = vsel %vm1466, %v1423, %v1490
        %v1515 = vsel %vm1467, %v1447, %v1491
        %v1516 = vsel %vm1468, %v1377, %v1492
        %v1517 = vsel %vm1469, %v1401, %v1493
        %v1518 = vsel %vm1470, %v1425, %v1494
        %v1519 = vsel %vm1471, %v1449, %v1495
        %v1520 = vsel %vm1472, %v1380, %v1496
        %v1521 = vsel %vm1473, %v1404, %v1497
        %v1522 = vsel %vm1474, %v1428, %v1498
        %v1523 = vsel %vm1475, %v1452, %v1499
        %v1524 = vsel %vm1476, %v1382, %v1500
        %v1525 = vsel %vm1477, %v1406, %v1501
        %v1526 = vsel %vm1478, %v1430, %v1502
        %v1527 = vsel %vm1479, %v1454, %v1503
        %v1528 = vld [vmem:[#allocation8] sm:$0xf]
        %v1529 = vld [vmem:[#allocation8 + $0x4] sm:$0xf]
        %v1530 = vld [vmem:[#allocation8 + $0x8] sm:$0xf]
        %v1531 = vld [vmem:[#allocation8 + $0xc] sm:$0xf]
        %v1532 = vld [vmem:[#allocation8 + $0x10] sm:$0xf]
        %v1533 = vld [vmem:[#allocation8 + $0x14] sm:$0x1]
        %v1534 = vpack.c.bf16 %v1508, %v1504
        %v1535 = vpack.c.bf16 %v1509, %v1505
        %v1536 = vpack.c.bf16 %v1510, %v1506
        %v1537 = vpack.c.bf16 %v1511, %v1507
        %v1538 = vpack.c.bf16 %v1516, %v1512
        %v1539 = vpack.c.bf16 %v1517, %v1513
        %v1540 = vpack.c.bf16 %v1518, %v1514
        %v1541 = vpack.c.bf16 %v1519, %v1515
        %v1542 = vpack.c.bf16 %v1524, %v1520
        %v1543 = vpack.c.bf16 %v1525, %v1521
        %v1544 = vpack.c.bf16 %v1526, %v1522
        %v1545 = vpack.c.bf16 %v1527, %v1523
        %v1546 = vld [vmem:[%s6] sm:$0xff]
        %v1547 = vld [vmem:[%s6 + $0x8] sm:$0xff]
        %v1548 = vld [vmem:[%s6 + $0x10] sm:$0xff]
        %v1549 = vld [vmem:[%s6 + $0x18] sm:$0xff]
        %v1550 = vld [vmem:[%s6 + $0x20] sm:$0xff]
        %v1551 = vld [vmem:[%s6 + $0x28] sm:$0x3]
        %1553 = vset.pattern.permute.xlu0 0
        %1554 = vperm.xlu0 %1553, %v1546
        %v1555 = vpop.permute.xlu0 %1554
        %1558 = vset.pattern.permute.xlu0 0
        %1559 = vperm.xlu0 %1558, %v1547
        %v1560 = vpop.permute.xlu0 %1559
        %1563 = vset.pattern.permute.xlu0 0
        %1564 = vperm.xlu0 %1563, %v1548
        %v1565 = vpop.permute.xlu0 %1564
        %1568 = vset.pattern.permute.xlu0 0
        %1569 = vperm.xlu0 %1568, %v1549
        %v1570 = vpop.permute.xlu0 %1569
        %1573 = vset.pattern.permute.xlu0 0
        %1574 = vperm.xlu0 %1573, %v1550
        %v1575 = vpop.permute.xlu0 %1574
        %1578 = vset.pattern.permute.xlu0 0
        %1579 = vperm.xlu0 %1578, %v1551
        %v1580 = vpop.permute.xlu0 %1579
        %v1588 = vunpack.c.l.b16 %v1528
        %v1589 = vunpack.c.l.b16 %v1529
        %v1590 = vunpack.c.l.b16 %v1530
        %v1591 = vunpack.c.l.b16 %v1531
        %v1592 = vunpack.c.l.b16 %v1532
        %v1593 = vunpack.c.l.b16 %v1533
        %v1594 = vpack.c.b16 %v1589, %v1588
        %v1595 = vpack.c.b16 %v1591, %v1590
        %v1596 = vpack.c.b16 %v1593, %v1592
        %vm1597 = vcmask 343040
        %v1599 = vsel %vm1597, %v1594, 0
        %v1602 = vsel %vm1597, %v1595, 0
        %v1605 = vsel %vm1597, %v1596, 0
        %vm1607 = vcmask 1044480
        %v1609 = vsel %vm1607, %v1542, 0
        %v1612 = vsel %vm1607, %v1543, 0
        %v1615 = vsel %vm1607, %v1544, 0
        %v1618 = vsel %vm1607, %v1545, 0
        %1620 = vmatpush.bf16.msra.mxu0 0
        %1621 = vmatpush.bf16.msra.mxu0 0
        %1622 = vmatpush.bf16.msra.mxu0 0
        %1623 = vmatpush.bf16.msra.mxu0 0
        %1624 = vmatpush.bf16.msra.mxu0 0
        %1625 = vmatpush.bf16.msra.mxu0 %v1609
        %1626 = vmatpush.bf16.msra.mxu0 %v1538
        %1627 = vmatpush.bf16.msra.mxu0 %v1534
        %1628 = vmatmul.bf16.gmra.mxu0 %v1599
        %v1629 = vpop.f32.mrf.mxu0
        %v1630 = vadd.f32 %v1555, %v1629
        %v1631 = vpop.f32.mrf.mxu0
        %v1632 = vadd.f32 %v1560, %v1631
        %1633 = vmatmul.bf16.gmra.mxu0 %v1602
        %v1634 = vpop.f32.mrf.mxu0
        %v1635 = vadd.f32 %v1565, %v1634
        %v1636 = vpop.f32.mrf.mxu0
        %v1637 = vadd.f32 %v1570, %v1636
        %1638 = vmatmul.bf16.gmra.mxu0 %v1605
        %v1639 = vpop.f32.mrf.mxu0
        %v1640 = vadd.f32 %v1575, %v1639
        %v1641 = vpop.f32.mrf.mxu0
        %v1642 = vadd.f32 %v1580, %v1641
        %1643 = vdwg.mxu0
        %1644 = vmatpush.bf16.msra.mxu0 0
        %1645 = vmatpush.bf16.msra.mxu0 0
        %1646 = vmatpush.bf16.msra.mxu0 0
        %1647 = vmatpush.bf16.msra.mxu0 0
        %1648 = vmatpush.bf16.msra.mxu0 0
        %1649 = vmatpush.bf16.msra.mxu0 %v1612
        %1650 = vmatpush.bf16.msra.mxu0 %v1539
        %1651 = vmatpush.bf16.msra.mxu0 %v1535
        %1652 = vmatmul.bf16.gmra.mxu0 %v1599
        %v1653 = vpop.f32.mrf.mxu0
        %v1654 = vadd.f32 %v1555, %v1653
        %v1655 = vpop.f32.mrf.mxu0
        %v1656 = vadd.f32 %v1560, %v1655
        %1657 = vmatmul.bf16.gmra.mxu0 %v1602
        %v1658 = vpop.f32.mrf.mxu0
        %v1659 = vadd.f32 %v1565, %v1658
        %v1660 = vpop.f32.mrf.mxu0
        %v1661 = vadd.f32 %v1570, %v1660
        %1662 = vmatmul.bf16.gmra.mxu0 %v1605
        %v1663 = vpop.f32.mrf.mxu0
        %v1664 = vadd.f32 %v1575, %v1663
        %v1665 = vpop.f32.mrf.mxu0
        %v1666 = vadd.f32 %v1580, %v1665
        %1667 = vdwg.mxu0
        %1668 = vmatpush.bf16.msra.mxu0 0
        %1669 = vmatpush.bf16.msra.mxu0 0
        %1670 = vmatpush.bf16.msra.mxu0 0
        %1671 = vmatpush.bf16.msra.mxu0 0
        %1672 = vmatpush.bf16.msra.mxu0 0
        %1673 = vmatpush.bf16.msra.mxu0 %v1615
        %1674 = vmatpush.bf16.msra.mxu0 %v1540
        %1675 = vmatpush.bf16.msra.mxu0 %v1536
        %1676 = vmatmul.bf16.gmra.mxu0 %v1599
        %v1677 = vpop.f32.mrf.mxu0
        %v1678 = vadd.f32 %v1555, %v1677
        %v1679 = vpop.f32.mrf.mxu0
        %v1680 = vadd.f32 %v1560, %v1679
        %1681 = vmatmul.bf16.gmra.mxu0 %v1602
        %v1682 = vpop.f32.mrf.mxu0
        %v1683 = vadd.f32 %v1565, %v1682
        %v1684 = vpop.f32.mrf.mxu0
        %v1685 = vadd.f32 %v1570, %v1684
        %1686 = vmatmul.bf16.gmra.mxu0 %v1605
        %v1687 = vpop.f32.mrf.mxu0
        %v1688 = vadd.f32 %v1575, %v1687
        %v1689 = vpop.f32.mrf.mxu0
        %v1690 = vadd.f32 %v1580, %v1689
        %1691 = vdwg.mxu0
        %1692 = vmatpush.bf16.msra.mxu0 0
        %1693 = vmatpush.bf16.msra.mxu0 0
        %1694 = vmatpush.bf16.msra.mxu0 0
        %1695 = vmatpush.bf16.msra.mxu0 0
        %1696 = vmatpush.bf16.msra.mxu0 0
        %1697 = vmatpush.bf16.msra.mxu0 %v1618
        %1698 = vmatpush.bf16.msra.mxu0 %v1541
        %1699 = vmatpush.bf16.msra.mxu0 %v1537
        %1700 = vmatmul.bf16.gmra.mxu0 %v1599
        %v1701 = vpop.f32.mrf.mxu0
        %v1702 = vadd.f32 %v1555, %v1701
        %v1703 = vpop.f32.mrf.mxu0
        %v1704 = vadd.f32 %v1560, %v1703
        %1705 = vmatmul.bf16.gmra.mxu0 %v1602
        %v1706 = vpop.f32.mrf.mxu0
        %v1707 = vadd.f32 %v1565, %v1706
        %v1708 = vpop.f32.mrf.mxu0
        %v1709 = vadd.f32 %v1570, %v1708
        %1710 = vmatmul.bf16.gmra.mxu0 %v1605
        %v1711 = vpop.f32.mrf.mxu0
        %v1712 = vadd.f32 %v1575, %v1711
        %v1713 = vpop.f32.mrf.mxu0
        %v1714 = vadd.f32 %v1580, %v1713
        %1715 = vdwg.mxu0
        %vm1716 = vcmp.ge.f32.partialorder %v1630, 0.0
        %vm1717 = vcmp.ge.f32.partialorder %v1654, 0.0
        %vm1718 = vcmp.ge.f32.partialorder %v1678, 0.0
        %vm1719 = vcmp.ge.f32.partialorder %v1702, 0.0
        %vm1720 = vcmp.ge.f32.partialorder %v1632, 0.0
        %vm1721 = vcmp.ge.f32.partialorder %v1656, 0.0
        %vm1722 = vcmp.ge.f32.partialorder %v1680, 0.0
        %vm1723 = vcmp.ge.f32.partialorder %v1704, 0.0
        %vm1724 = vcmp.ge.f32.partialorder %v1635, 0.0
        %vm1725 = vcmp.ge.f32.partialorder %v1659, 0.0
        %vm1726 = vcmp.ge.f32.partialorder %v1683, 0.0
        %vm1727 = vcmp.ge.f32.partialorder %v1707, 0.0
        %vm1728 = vcmp.ge.f32.partialorder %v1637, 0.0
        %vm1729 = vcmp.ge.f32.partialorder %v1661, 0.0
        %vm1730 = vcmp.ge.f32.partialorder %v1685, 0.0
        %vm1731 = vcmp.ge.f32.partialorder %v1709, 0.0
        %vm1732 = vcmp.ge.f32.partialorder %v1640, 0.0
        %vm1733 = vcmp.ge.f32.partialorder %v1664, 0.0
        %vm1734 = vcmp.ge.f32.partialorder %v1688, 0.0
        %vm1735 = vcmp.ge.f32.partialorder %v1712, 0.0
        %vm1736 = vcmp.ge.f32.partialorder %v1642, 0.0
        %vm1737 = vcmp.ge.f32.partialorder %v1666, 0.0
        %vm1738 = vcmp.ge.f32.partialorder %v1690, 0.0
        %vm1739 = vcmp.ge.f32.partialorder %v1714, 0.0
        %v1740 = vmul.f32 %v1630, 0.01
        %v1741 = vmul.f32 %v1654, 0.01
        %v1742 = vmul.f32 %v1678, 0.01
        %v1743 = vmul.f32 %v1702, 0.01
        %v1744 = vmul.f32 %v1632, 0.01
        %v1745 = vmul.f32 %v1656, 0.01
        %v1746 = vmul.f32 %v1680, 0.01
        %v1747 = vmul.f32 %v1704, 0.01
        %v1748 = vmul.f32 %v1635, 0.01
        %v1749 = vmul.f32 %v1659, 0.01
        %v1750 = vmul.f32 %v1683, 0.01
        %v1751 = vmul.f32 %v1707, 0.01
        %v1752 = vmul.f32 %v1637, 0.01
        %v1753 = vmul.f32 %v1661, 0.01
        %v1754 = vmul.f32 %v1685, 0.01
        %v1755 = vmul.f32 %v1709, 0.01
        %v1756 = vmul.f32 %v1640, 0.01
        %v1757 = vmul.f32 %v1664, 0.01
        %v1758 = vmul.f32 %v1688, 0.01
        %v1759 = vmul.f32 %v1712, 0.01
        %v1760 = vmul.f32 %v1642, 0.01
        %v1761 = vmul.f32 %v1666, 0.01
        %v1762 = vmul.f32 %v1690, 0.01
        %v1763 = vmul.f32 %v1714, 0.01
        %v1764 = vsel %vm1716, %v1630, %v1740
        %v1765 = vsel %vm1717, %v1654, %v1741
        %v1766 = vsel %vm1718, %v1678, %v1742
        %v1767 = vsel %vm1719, %v1702, %v1743
        %v1768 = vsel %vm1720, %v1632, %v1744
        %v1769 = vsel %vm1721, %v1656, %v1745
        %v1770 = vsel %vm1722, %v1680, %v1746
        %v1771 = vsel %vm1723, %v1704, %v1747
        %v1772 = vsel %vm1724, %v1635, %v1748
        %v1773 = vsel %vm1725, %v1659, %v1749
        %v1774 = vsel %vm1726, %v1683, %v1750
        %v1775 = vsel %vm1727, %v1707, %v1751
        %v1776 = vsel %vm1728, %v1637, %v1752
        %v1777 = vsel %vm1729, %v1661, %v1753
        %v1778 = vsel %vm1730, %v1685, %v1754
        %v1779 = vsel %vm1731, %v1709, %v1755
        %v1780 = vsel %vm1732, %v1640, %v1756
        %v1781 = vsel %vm1733, %v1664, %v1757
        %v1782 = vsel %vm1734, %v1688, %v1758
        %v1783 = vsel %vm1735, %v1712, %v1759
        %v1784 = vsel %vm1736, %v1642, %v1760
        %v1785 = vsel %vm1737, %v1666, %v1761
        %v1786 = vsel %vm1738, %v1690, %v1762
        %v1787 = vsel %vm1739, %v1714, %v1763
        %v1788 = vld [vmem:[#allocation9] sm:$0xf]
        %v1789 = vld [vmem:[#allocation9 + $0x4] sm:$0xf]
        %v1790 = vld [vmem:[#allocation9 + $0x8] sm:$0x7]
        %v1791 = vpack.c.bf16 %v1768, %v1764
        %v1792 = vpack.c.bf16 %v1769, %v1765
        %v1793 = vpack.c.bf16 %v1770, %v1766
        %v1794 = vpack.c.bf16 %v1771, %v1767
        %v1795 = vpack.c.bf16 %v1776, %v1772
        %v1796 = vpack.c.bf16 %v1777, %v1773
        %v1797 = vpack.c.bf16 %v1778, %v1774
        %v1798 = vpack.c.bf16 %v1779, %v1775
        %v1799 = vpack.c.bf16 %v1784, %v1780
        %v1800 = vpack.c.bf16 %v1785, %v1781
        %v1801 = vpack.c.bf16 %v1786, %v1782
        %v1802 = vpack.c.bf16 %v1787, %v1783
        %v1803 = vld [vmem:[%s8] sm:$0xff]
        %v1804 = vld [vmem:[%s8 + $0x8] sm:$0xff]
        %v1805 = vld [vmem:[%s8 + $0x10] sm:$0x1f]
        %1807 = vset.pattern.permute.xlu0 0
        %1808 = vperm.xlu0 %1807, %v1803
        %v1809 = vpop.permute.xlu0 %1808
        %1812 = vset.pattern.permute.xlu0 0
        %1813 = vperm.xlu0 %1812, %v1804
        %v1814 = vpop.permute.xlu0 %1813
        %1817 = vset.pattern.permute.xlu0 0
        %1818 = vperm.xlu0 %1817, %v1805
        %v1819 = vpop.permute.xlu0 %1818
        %v1824 = vunpack.c.l.b16 %v1788
        %v1825 = vunpack.c.l.b16 %v1789
        %v1826 = vunpack.c.l.b16 %v1790
        %v1827 = vpack.c.b16 %v1825, %v1824
        %v1828 = vpack.c.b16 %v1826, %v1826
        %v1830 = vsel %vm1597, %v1827, 0
        %v1833 = vsel %vm1597, %v1828, 0
        %v1836 = vsel %vm1607, %v1799, 0
        %v1839 = vsel %vm1607, %v1800, 0
        %v1842 = vsel %vm1607, %v1801, 0
        %v1845 = vsel %vm1607, %v1802, 0
        %1847 = vmatpush.bf16.msra.mxu0 0
        %1848 = vmatpush.bf16.msra.mxu0 0
        %1849 = vmatpush.bf16.msra.mxu0 0
        %1850 = vmatpush.bf16.msra.mxu0 0
        %1851 = vmatpush.bf16.msra.mxu0 0
        %1852 = vmatpush.bf16.msra.mxu0 %v1836
        %1853 = vmatpush.bf16.msra.mxu0 %v1795
        %1854 = vmatpush.bf16.msra.mxu0 %v1791
        %1855 = vmatmul.bf16.gmra.mxu0 %v1830
        %v1856 = vpop.f32.mrf.mxu0
        %v1857 = vadd.f32 %v1809, %v1856
        %v1858 = vpop.f32.mrf.mxu0
        %v1859 = vadd.f32 %v1814, %v1858
        %1860 = vmatmul.bf16.gmra.mxu0 %v1833
        %v1861 = vpop.f32.mrf.mxu0
        %v1862 = vadd.f32 %v1819, %v1861
        %v1863 = vpop.f32.mrf.mxu0
        %1864 = vdwg.mxu0
        %1865 = vmatpush.bf16.msra.mxu0 0
        %1866 = vmatpush.bf16.msra.mxu0 0
        %1867 = vmatpush.bf16.msra.mxu0 0
        %1868 = vmatpush.bf16.msra.mxu0 0
        %1869 = vmatpush.bf16.msra.mxu0 0
        %1870 = vmatpush.bf16.msra.mxu0 %v1839
        %1871 = vmatpush.bf16.msra.mxu0 %v1796
        %1872 = vmatpush.bf16.msra.mxu0 %v1792
        %1873 = vmatmul.bf16.gmra.mxu0 %v1830
        %v1874 = vpop.f32.mrf.mxu0
        %v1875 = vadd.f32 %v1809, %v1874
        %v1876 = vpop.f32.mrf.mxu0
        %v1877 = vadd.f32 %v1814, %v1876
        %1878 = vmatmul.bf16.gmra.mxu0 %v1833
        %v1879 = vpop.f32.mrf.mxu0
        %v1880 = vadd.f32 %v1819, %v1879
        %v1881 = vpop.f32.mrf.mxu0
        %1882 = vdwg.mxu0
        %1883 = vmatpush.bf16.msra.mxu0 0
        %1884 = vmatpush.bf16.msra.mxu0 0
        %1885 = vmatpush.bf16.msra.mxu0 0
        %1886 = vmatpush.bf16.msra.mxu0 0
        %1887 = vmatpush.bf16.msra.mxu0 0
        %1888 = vmatpush.bf16.msra.mxu0 %v1842
        %1889 = vmatpush.bf16.msra.mxu0 %v1797
        %1890 = vmatpush.bf16.msra.mxu0 %v1793
        %1891 = vmatmul.bf16.gmra.mxu0 %v1830
        %v1892 = vpop.f32.mrf.mxu0
        %v1893 = vadd.f32 %v1809, %v1892
        %v1894 = vpop.f32.mrf.mxu0
        %v1895 = vadd.f32 %v1814, %v1894
        %1896 = vmatmul.bf16.gmra.mxu0 %v1833
        %v1897 = vpop.f32.mrf.mxu0
        %v1898 = vadd.f32 %v1819, %v1897
        %v1899 = vpop.f32.mrf.mxu0
        %1900 = vdwg.mxu0
        %1901 = vmatpush.bf16.msra.mxu0 0
        %1902 = vmatpush.bf16.msra.mxu0 0
        %1903 = vmatpush.bf16.msra.mxu0 0
        %1904 = vmatpush.bf16.msra.mxu0 0
        %1905 = vmatpush.bf16.msra.mxu0 0
        %1906 = vmatpush.bf16.msra.mxu0 %v1845
        %1907 = vmatpush.bf16.msra.mxu0 %v1798
        %1908 = vmatpush.bf16.msra.mxu0 %v1794
        %1909 = vmatmul.bf16.gmra.mxu0 %v1830
        %v1910 = vpop.f32.mrf.mxu0
        %v1911 = vadd.f32 %v1809, %v1910
        %v1912 = vpop.f32.mrf.mxu0
        %v1913 = vadd.f32 %v1814, %v1912
        %1914 = vmatmul.bf16.gmra.mxu0 %v1833
        %v1915 = vpop.f32.mrf.mxu0
        %v1916 = vadd.f32 %v1819, %v1915
        %v1917 = vpop.f32.mrf.mxu0
        %1918 = vdwg.mxu0
        %vm1919 = vcmp.ge.f32.partialorder %v1857, 0.0
        %vm1920 = vcmp.ge.f32.partialorder %v1875, 0.0
        %vm1921 = vcmp.ge.f32.partialorder %v1893, 0.0
        %vm1922 = vcmp.ge.f32.partialorder %v1911, 0.0
        %vm1923 = vcmp.ge.f32.partialorder %v1859, 0.0
        %vm1924 = vcmp.ge.f32.partialorder %v1877, 0.0
        %vm1925 = vcmp.ge.f32.partialorder %v1895, 0.0
        %vm1926 = vcmp.ge.f32.partialorder %v1913, 0.0
        %vm1927 = vcmp.ge.f32.partialorder %v1862, 0.0
        %vm1928 = vcmp.ge.f32.partialorder %v1880, 0.0
        %vm1929 = vcmp.ge.f32.partialorder %v1898, 0.0
        %vm1930 = vcmp.ge.f32.partialorder %v1916, 0.0
        %v1931 = vmul.f32 %v1857, 0.01
        %v1932 = vmul.f32 %v1875, 0.01
        %v1933 = vmul.f32 %v1893, 0.01
        %v1934 = vmul.f32 %v1911, 0.01
        %v1935 = vmul.f32 %v1859, 0.01
        %v1936 = vmul.f32 %v1877, 0.01
        %v1937 = vmul.f32 %v1895, 0.01
        %v1938 = vmul.f32 %v1913, 0.01
        %v1939 = vmul.f32 %v1862, 0.01
        %v1940 = vmul.f32 %v1880, 0.01
        %v1941 = vmul.f32 %v1898, 0.01
        %v1942 = vmul.f32 %v1916, 0.01
        %v1943 = vsel %vm1919, %v1857, %v1931
        %v1944 = vsel %vm1920, %v1875, %v1932
        %v1945 = vsel %vm1921, %v1893, %v1933
        %v1946 = vsel %vm1922, %v1911, %v1934
        %v1947 = vsel %vm1923, %v1859, %v1935
        %v1948 = vsel %vm1924, %v1877, %v1936
        %v1949 = vsel %vm1925, %v1895, %v1937
        %v1950 = vsel %vm1926, %v1913, %v1938
        %v1951 = vsel %vm1927, %v1862, %v1939
        %v1952 = vsel %vm1928, %v1880, %v1940
        %v1953 = vsel %vm1929, %v1898, %v1941
        %v1954 = vsel %vm1930, %v1916, %v1942
        %v1955 = vld [vmem:[#allocation11] sm:$0xf]
        %v1956 = vld [vmem:[#allocation11 + $0x4] sm:$0x1]
        %v1957 = vpack.c.bf16 %v1947, %v1943
        %v1958 = vpack.c.bf16 %v1948, %v1944
        %v1959 = vpack.c.bf16 %v1949, %v1945
        %v1960 = vpack.c.bf16 %v1950, %v1946
        %v1961 = vpack.c.bf16 %v1951, %v1951
        %v1962 = vpack.c.bf16 %v1952, %v1952
        %v1963 = vpack.c.bf16 %v1953, %v1953
        %v1964 = vpack.c.bf16 %v1954, %v1954
        %v1965 = vld [vmem:[%s10] sm:$0xff]
        %v1966 = vld [vmem:[%s10 + $0x8] sm:$0x3]
        %1968 = vset.pattern.permute.xlu0 0
        %1969 = vperm.xlu0 %1968, %v1965
        %v1970 = vpop.permute.xlu0 %1969
        %1973 = vset.pattern.permute.xlu0 0
        %1974 = vperm.xlu0 %1973, %v1966
        %v1975 = vpop.permute.xlu0 %1974
        %v1979 = vunpack.c.l.b16 %v1955
        %v1980 = vunpack.c.l.b16 %v1956
        %v1981 = vpack.c.b16 %v1980, %v1979
        %vm1982 = vcmask 171008
        %v1984 = vsel %vm1982, %v1981, 0
        %vm1986 = vcmask 1042432
        %v1987 = vsel %vm1347, 4294967295, 65535
        %v1988 = vsel %vm1986, %v1987, 0
        %v1990 = vand.u32 %v1961, %v1988
        %v1993 = vand.u32 %v1962, %v1988
        %v1996 = vand.u32 %v1963, %v1988
        %v1999 = vand.u32 %v1964, %v1988
        %2001 = vmatpush.bf16.msra.mxu0 0
        %2002 = vmatpush.bf16.msra.mxu0 0
        %2003 = vmatpush.bf16.msra.mxu0 0
        %2004 = vmatpush.bf16.msra.mxu0 0
        %2005 = vmatpush.bf16.msra.mxu0 0
        %2006 = vmatpush.bf16.msra.mxu0 0
        %2007 = vmatpush.bf16.msra.mxu0 %v1990
        %2008 = vmatpush.bf16.msra.mxu0 %v1957
        %2009 = vmatmul.bf16.gmra.mxu0 %v1984
        %v2010 = vpop.f32.mrf.mxu0
        %v2011 = vadd.f32 %v1970, %v2010
        %v2012 = vpop.f32.mrf.mxu0
        %v2013 = vadd.f32 %v1975, %v2012
        %2014 = vdwg.mxu0
        %2015 = vmatpush.bf16.msra.mxu0 0
        %2016 = vmatpush.bf16.msra.mxu0 0
        %2017 = vmatpush.bf16.msra.mxu0 0
        %2018 = vmatpush.bf16.msra.mxu0 0
        %2019 = vmatpush.bf16.msra.mxu0 0
        %2020 = vmatpush.bf16.msra.mxu0 0
        %2021 = vmatpush.bf16.msra.mxu0 %v1993
        %2022 = vmatpush.bf16.msra.mxu0 %v1958
        %2023 = vmatmul.bf16.gmra.mxu0 %v1984
        %v2024 = vpop.f32.mrf.mxu0
        %v2025 = vadd.f32 %v1970, %v2024
        %v2026 = vpop.f32.mrf.mxu0
        %v2027 = vadd.f32 %v1975, %v2026
        %2028 = vdwg.mxu0
        %2029 = vmatpush.bf16.msra.mxu0 0
        %2030 = vmatpush.bf16.msra.mxu0 0
        %2031 = vmatpush.bf16.msra.mxu0 0
        %2032 = vmatpush.bf16.msra.mxu0 0
        %2033 = vmatpush.bf16.msra.mxu0 0
        %2034 = vmatpush.bf16.msra.mxu0 0
        %2035 = vmatpush.bf16.msra.mxu0 %v1996
        %2036 = vmatpush.bf16.msra.mxu0 %v1959
        %2037 = vmatmul.bf16.gmra.mxu0 %v1984
        %v2038 = vpop.f32.mrf.mxu0
        %v2039 = vadd.f32 %v1970, %v2038
        %v2040 = vpop.f32.mrf.mxu0
        %v2041 = vadd.f32 %v1975, %v2040
        %2042 = vdwg.mxu0
        %2043 = vmatpush.bf16.msra.mxu0 0
        %2044 = vmatpush.bf16.msra.mxu0 0
        %2045 = vmatpush.bf16.msra.mxu0 0
        %2046 = vmatpush.bf16.msra.mxu0 0
        %2047 = vmatpush.bf16.msra.mxu0 0
        %2048 = vmatpush.bf16.msra.mxu0 0
        %2049 = vmatpush.bf16.msra.mxu0 %v1999
        %2050 = vmatpush.bf16.msra.mxu0 %v1960
        %2051 = vmatmul.bf16.gmra.mxu0 %v1984
        %v2052 = vpop.f32.mrf.mxu0
        %v2053 = vadd.f32 %v1970, %v2052
        %v2054 = vpop.f32.mrf.mxu0
        %v2055 = vadd.f32 %v1975, %v2054
        %2056 = vdwg.mxu0
        %vm2057 = vcmp.ge.f32.partialorder %v2011, 0.0
        %vm2058 = vcmp.ge.f32.partialorder %v2025, 0.0
        %vm2059 = vcmp.ge.f32.partialorder %v2039, 0.0
        %vm2060 = vcmp.ge.f32.partialorder %v2053, 0.0
        %vm2061 = vcmp.ge.f32.partialorder %v2013, 0.0
        %vm2062 = vcmp.ge.f32.partialorder %v2027, 0.0
        %vm2063 = vcmp.ge.f32.partialorder %v2041, 0.0
        %vm2064 = vcmp.ge.f32.partialorder %v2055, 0.0
        %v2065 = vmul.f32 %v2011, 0.01
        %v2066 = vmul.f32 %v2025, 0.01
        %v2067 = vmul.f32 %v2039, 0.01
        %v2068 = vmul.f32 %v2053, 0.01
        %v2069 = vmul.f32 %v2013, 0.01
        %v2070 = vmul.f32 %v2027, 0.01
        %v2071 = vmul.f32 %v2041, 0.01
        %v2072 = vmul.f32 %v2055, 0.01
        %v2073 = vsel %vm2057, %v2011, %v2065
        %v2074 = vsel %vm2058, %v2025, %v2066
        %v2075 = vsel %vm2059, %v2039, %v2067
        %v2076 = vsel %vm2060, %v2053, %v2068
        %v2077 = vsel %vm2061, %v2013, %v2069
        %v2078 = vsel %vm2062, %v2027, %v2070
        %v2079 = vsel %vm2063, %v2041, %v2071
        %v2080 = vsel %vm2064, %v2055, %v2072
        %v2081 = vld [vmem:[%s11] sm:$0xff]
        %v2082 = vld [vmem:[%s11 + $0x8] sm:$0x3]
        %2084 = vset.pattern.permute.xlu0 0
        %2085 = vperm.xlu0 %2084, %v2081
        %v2086 = vpop.permute.xlu0 %2085
        %2089 = vset.pattern.permute.xlu0 0
        %2090 = vperm.xlu0 %2089, %v2082
        %v2091 = vpop.permute.xlu0 %2090
        %v2093 = vmul.f32 %v2073, %v2086
        %v2094 = vmul.f32 %v2074, %v2086
        %v2095 = vmul.f32 %v2075, %v2086
        %v2096 = vmul.f32 %v2076, %v2086
        %v2097 = vmul.f32 %v2077, %v2091
        %v2098 = vmul.f32 %v2078, %v2091
        %v2099 = vmul.f32 %v2079, %v2091
        %v2100 = vmul.f32 %v2080, %v2091
        %v2101 = vsel %vm1347, %v2097, 0.0
        %v2102 = vadd.f32 %v2093, %v2101
        %v2103 = vrot.slane %v2102, 4
        %v2104 = vadd.f32 %v2102, %v2103
        %v2105 = vrot.slane %v2104, 2
        %v2106 = vadd.f32 %v2104, %v2105
        %v2107 = vrot.slane %v2106, 1
        %v2108 = vadd.f32 %v2106, %v2107
        %v2109 = vsel %vm1347, %v2098, 0.0
        %v2110 = vadd.f32 %v2094, %v2109
        %v2111 = vrot.slane %v2110, 4
        %v2112 = vadd.f32 %v2110, %v2111
        %v2113 = vrot.slane %v2112, 2
        %v2114 = vadd.f32 %v2112, %v2113
        %v2115 = vrot.slane %v2114, 1
        %v2116 = vadd.f32 %v2114, %v2115
        %v2117 = vsel %vm1347, %v2099, 0.0
        %v2118 = vadd.f32 %v2095, %v2117
        %v2119 = vrot.slane %v2118, 4
        %v2120 = vadd.f32 %v2118, %v2119
        %v2121 = vrot.slane %v2120, 2
        %v2122 = vadd.f32 %v2120, %v2121
        %v2123 = vrot.slane %v2122, 1
        %v2124 = vadd.f32 %v2122, %v2123
        %v2125 = vsel %vm1347, %v2100, 0.0
        %v2126 = vadd.f32 %v2096, %v2125
        %v2127 = vrot.slane %v2126, 4
        %v2128 = vadd.f32 %v2126, %v2127
        %v2129 = vrot.slane %v2128, 2
        %v2130 = vadd.f32 %v2128, %v2129
        %v2131 = vrot.slane %v2130, 1
        %v2132 = vadd.f32 %v2130, %v2131
        %v2133 = vld [vmem:[#allocation2] sm:$0x1]
        %2135 = vset.pattern.permute.xlu0 0
        %2136 = vperm.xlu0 %2135, %v2133
        %v2137 = vpop.permute.xlu0 %2136
        %v2139 = vperm.slane %v2137, 0
        %v2140 = vadd.f32 %v2108, %v2139
        %v2141 = vadd.f32 %v2116, %v2139
        %v2142 = vadd.f32 %v2124, %v2139
        %v2143 = vadd.f32 %v2132, %v2139
        %vm2144 = vcmp.ge.f32.partialorder %v2140, 0.0
        %vm2145 = vcmp.ge.f32.partialorder %v2141, 0.0
        %vm2146 = vcmp.ge.f32.partialorder %v2142, 0.0
        %vm2147 = vcmp.ge.f32.partialorder %v2143, 0.0
        %v2148 = vmul.f32 %v2140, 0.01
        %v2149 = vmul.f32 %v2141, 0.01
        %v2150 = vmul.f32 %v2142, 0.01
        %v2151 = vmul.f32 %v2143, 0.01
        %v2152 = vsel %vm2144, %v2140, %v2148
        %v2153 = vsel %vm2145, %v2141, %v2149
        %v2154 = vsel %vm2146, %v2142, %v2150
        %v2155 = vsel %vm2147, %v2143, %v2151
        %v2160 = vrot.slane %v2153, 7
        %v2161 = vrot.slane %v2154, 6
        %v2162 = vrot.slane %v2155, 5
        %vm2163 = vcmask 1040384
        %v2164 = vsel %vm2163, %v2152, %v2160
        %vm2165 = vcmask 1042434
        %v2166 = vsel %vm2165, %v2161, %v2162
        %v2167 = vsel %vm1347, %v2164, %v2166
        %v2169 = vlaneseq
        %vm2170 = vcmp.ge.s32.totalorder %v2169, 0
        %vm2171 = vcmp.lt.s32.totalorder %v2169, 512
        %vm2172 = vmand %vm2170, %vm2171
        %2173 = vst.msk [vmem:[%s528] sm:$0xf] %vm2172, %v2167
        %s2174 = sand.u32 %s320, 1
        %s2175 = scalar_lea.sflag [#allocation5], %s2174
        %s2176 = sand.u32 %s320, 1
        %s2177 = smul.addr %s2176, 4
        %s2178 = scalar_lea.vmem [#allocation12], %s2177
        // Predicated region
        $region93: #{tpu_custom_call.1} parent=71 // pred_check
          %p2179 = pneg %p330
        $region94: #{tpu_custom_call.1} parent=71 // pred_check_branch
          %2181 = sbr.rel (%p2179) target = $region96
        $region95: #{tpu_custom_call.1} parent=71 // pred_region
          %s2182 = smul.u32 4, %s34
          %2184 = vsyncadd %s2175, 0
          %s2185 = scalar_lea.hbm %s13, %s2182
          %s2187 = sshll.u32 %s2178, 4
          %s2188 = int_to_ptr.vmem [resolvable:$true] %s2187
          %s2189 = sshll.u32 %s2185, 4
          %s2190 = int_to_ptr.hbm [resolvable:$true] %s2189
          %2192 = dma.vmem_to_hbm [thread:$0]  %s2188, 64, %s2190, %s2175
        $region96: #{tpu_custom_call.1} parent=71 // pred_fallthru
          _
      $region72: #{tpu_custom_call.1} parent=5 // pred_fallthru
        _
      %p2193 = scmp.le.s32.totalorder 2, %s29
      // Predicated region
      $region97: #{tpu_custom_call.1} parent=5 // pred_check
        %p2194 = pneg %p2193
      $region98: #{tpu_custom_call.1} parent=5 // pred_check_branch
        %2196 = sbr.rel (%p2194) target = $region100
      $region99: #{tpu_custom_call.1} parent=5 // pred_region
        %s2197 = ssub.s32 %s29, 2
        // Predicated region
        $region101: #{tpu_custom_call.1} parent=99 // pred_check
          %p2198 = pneg %p336
        $region102: #{tpu_custom_call.1} parent=99 // pred_check_branch
          %2200 = sbr.rel (%p2198) target = $region104
        $region103: #{tpu_custom_call.1} parent=99 // pred_region
          %s2201 = sand.u32 %s321, 1
          %s2202 = scalar_lea.sflag [#allocation5], %s2201
          %s2203 = sand.u32 %s321, 1
          %s2204 = smul.addr %s2203, 4
          %s2205 = scalar_lea.vmem [#allocation12], %s2204
          %2207 = dma.done %s2202, 64
        $region104: #{tpu_custom_call.1} parent=99 // pred_fallthru
          _
      $region100: #{tpu_custom_call.1} parent=5 // pred_fallthru
        _
    $region6: #{tpu_custom_call.1} parent=1 // loop_footer
      %s33 = sadd.s32 1, %s29
    $region7: #{tpu_custom_call.1} parent=1 // loop_footer_branch
      %28 = sbr.rel target = $region3
    $region8: #{tpu_custom_call.1} parent=1 // loop_exit
      _
    %2208 = vsyncpa [#allocation4], 1
    %s2209 = scalar_lea.sflag [#allocation4], 1
    %2210 = vsyncpa %s2209, 1
    %2211 = vsyncpa [#allocation7], 1
    %2212 = vsyncpa [#allocation10], 1
    %2213 = vsyncpa [#allocation5], 1
    %s2214 = scalar_lea.sflag [#allocation5], 1
    %2215 = vsyncpa %s2214, 1

</llo_original>
